<compile_context>
chip_gen: v7x
topology: tpu7x:2x2x1
jax: 0.10.0
libtpu: 0.0.40
codegen_flags: <defaults>
</compile_context>

<pallas_src>
import functools

import jax
import jax.numpy as jnp
from jax import lax
from jax.experimental import pallas as pl
from jax.experimental.pallas import tpu as pltpu

HIDDEN = 256
OUT_LANES = 128          # lane-dense output slab width (multiple of 128)


def _round_up(x, m):
    return (x + m - 1) // m * m


def _pg_fused_kernel(x_ref, w1_ref, b1_ref, w2_ref, b2_ref, out_ref, *,
                     action_size):
    # x_ref : [TB, S]   bf16 activations for this batch tile
    # w1_ref: [S, 2H]   bf16  (actor cols [0,H), critic cols [H,2H))
    # b1_ref: [1, 2H]   f32
    # w2_ref: [2H, P]   bf16  block-diagonal (actor -> lanes [0,A),
    #                          critic -> lanes [A,2A), zeros elsewhere)
    # b2_ref: [1, P]    f32
    # out   : [TB, P]   f32: lanes [0,A)=actor softmax, [A,2A)=critic, rest 0

    # ---- fused layer 1: one MXU pass (N = 2H); bias + ReLU on VPU, f32 ----
    h = jnp.maximum(
        jnp.dot(x_ref[...], w1_ref[...], preferred_element_type=jnp.float32)
        + b1_ref[...],
        0.0)                                                # [TB, 2H] f32

    # ---- fused layer 2: one MXU pass into a lane-dense [TB, P] tile ----
    z = jnp.dot(h.astype(jnp.bfloat16), w2_ref[...],
                preferred_element_type=jnp.float32) + b2_ref[...]   # f32

    # ---- masked softmax over the actor lanes only (all f32) ----
    cols = lax.broadcasted_iota(jnp.int32, z.shape, 1)
    is_actor = cols < action_size
    masked = jnp.where(is_actor, z, -jnp.inf)               # pad lanes -> -inf
    m = jnp.max(masked, axis=-1, keepdims=True)
    e = jnp.exp(masked - m)                                 # pad lanes -> 0
    denom = jnp.sum(e, axis=-1, keepdims=True)
    probs = e / denom                                       # exact divide

    # ---- single lane-dense store: actor probs | critic values | zeros ----
    out_ref[...] = jnp.where(is_actor, probs, z)


def pack_params(params):
    """Pack raw per-layer params into the fused (bf16) layout for the kernel."""
    H = params["w1a"].shape[1]
    A = params["w2a"].shape[1]
    P = _round_up(max(2 * A, OUT_LANES), OUT_LANES)
    assert A >= 1 and 2 * A <= P, "need 1 <= action_size and 2*A <= lane width"

    # layer 1: [S, 2H] weights (bf16) + [1, 2H] bias (f32).
    w1 = jnp.concatenate([params["w1a"], params["w1c"]],
                         axis=1).astype(jnp.bfloat16)
    b1 = jnp.concatenate([params["b1a"], params["b1c"]],
                         axis=1).astype(jnp.float32)

    # layer 2: block-diagonal [2H, P] (bf16) + [1, P] bias (f32).
    w2 = jnp.zeros((2 * H, P), jnp.float32)
    w2 = w2.at[:H, :A].set(params["w2a"])
    w2 = w2.at[H:, A:2 * A].set(params["w2c"])
    w2 = w2.astype(jnp.bfloat16)

    b2 = jnp.zeros((1, P), jnp.float32)
    b2 = b2.at[:, :A].set(params["b2a"])
    b2 = b2.at[:, A:2 * A].set(params["b2c"])

    return {"w1": w1, "b1": b1, "w2": w2, "b2": b2}, A


@functools.partial(jax.jit, static_argnames=("action_size",))
def policy_gradient_forward(state, packed, *, action_size):
    """state: [B, S] float32. packed: dict from pack_params. Returns (actor, critic)."""
    B, S = state.shape
    H2 = packed["w1"].shape[1]          # 2 * HIDDEN
    P = packed["w2"].shape[1]

    # Batch tile: multiple of 8, capped at 256; pad B up so the grid is exact.
    TB = 256 if B >= 256 else _round_up(max(B, 8), 8)
    B_pad = _round_up(B, TB)

    x = state.astype(jnp.bfloat16)
    if B_pad != B:
        x = jnp.pad(x, ((0, B_pad - B), (0, 0)))

    grid = (B_pad // TB,)

    bytes_accessed = (x.size * 2 + packed["w1"].size * 2 + packed["b1"].size * 4
                      + packed["w2"].size * 2 + packed["b2"].size * 4
                      + B_pad * P * 4)
    cost = pl.CostEstimate(flops=2 * B_pad * (S * H2 + H2 * P),
                           transcendentals=B_pad * P,
                           bytes_accessed=bytes_accessed)

    out = pl.pallas_call(
        functools.partial(_pg_fused_kernel, action_size=action_size),
        out_shape=jax.ShapeDtypeStruct((B_pad, P), jnp.float32),
        grid=grid,
        in_specs=[
            pl.BlockSpec((TB, S), lambda i: (i, 0)),     # batch-tiled activations
            pl.BlockSpec((S, H2), lambda i: (0, 0)),     # weights stay VMEM-resident
            pl.BlockSpec((1, H2), lambda i: (0, 0)),
            pl.BlockSpec((H2, P), lambda i: (0, 0)),
            pl.BlockSpec((1, P), lambda i: (0, 0)),
        ],
        out_specs=pl.BlockSpec((TB, P), lambda i: (i, 0)),
        compiler_params=pltpu.CompilerParams(
            dimension_semantics=("parallel",)),
        cost_estimate=cost,
    )(x, packed["w1"], packed["b1"], packed["w2"], packed["b2"])

    actor = out[:B, :action_size]
    critic = out[:B, action_size:2 * action_size]
    return actor, critic


def _linear_init(key, fan_in, fan_out):
    """Deterministic init mimicking torch.nn.Linear default (uniform +-1/sqrt(fan_in))."""
    kw, kb = jax.random.split(key)
    bound = 1.0 / jnp.sqrt(jnp.float32(fan_in))
    w = jax.random.uniform(kw, (fan_in, fan_out), jnp.float32, -bound, bound)
    b = jax.random.uniform(kb, (1, fan_out), jnp.float32, -bound, bound)
    return w, b


def make_params(key, state_size, action_size, hidden=HIDDEN):
    k1, k2, k3, k4 = jax.random.split(key, 4)
    w1a, b1a = _linear_init(k1, state_size, hidden)
    w2a, b2a = _linear_init(k2, hidden, action_size)
    w1c, b1c = _linear_init(k3, state_size, hidden)
    w2c, b2c = _linear_init(k4, hidden, action_size)
    return dict(w1a=w1a, b1a=b1a, w2a=w2a, b2a=b2a,
                w1c=w1c, b1c=b1c, w2c=w2c, b2c=b2c)


def _reference_forward(state, p):
    h_a = jnp.maximum(state @ p["w1a"] + p["b1a"], 0.0)
    actor = jax.nn.softmax(h_a @ p["w2a"] + p["b2a"], axis=-1)
    h_c = jnp.maximum(state @ p["w1c"] + p["b1c"], 0.0)
    critic = h_c @ p["w2c"] + p["b2c"]
    return actor, critic


if __name__ == "__main__":
    key = jax.random.PRNGKey(0)
    k_params, k_state1, k_state2 = jax.random.split(key, 3)

    S, A = 8, 4
    params = make_params(k_params, S, A)
    packed, action_size = pack_params(params)

    # Large batched call (the intended usage: vectorized envs, grid over B)
    # plus a tiny non-multiple-of-8 batch to exercise the padding path.
    for B, k_state in ((512, k_state1), (6, k_state2)):
        state = jax.random.normal(k_state, (B, S), jnp.float32)
        actor_probs, critic_out = policy_gradient_forward(
            state, packed, action_size=action_size)
        jax.block_until_ready((actor_probs, critic_out))

        ref_actor, ref_critic = _reference_forward(state, params)
        assert actor_probs.shape == (B, A) and critic_out.shape == (B, A)
        # exact-division softmax: rows sum to 1 tightly.
        assert jnp.allclose(jnp.sum(actor_probs, axis=-1), 1.0, atol=1e-5)
        # bf16 weights/activations (f32 accumulation) -> small drift vs f32 ref.
        assert jnp.allclose(actor_probs, ref_actor, atol=2e-2, rtol=2e-2)
        assert jnp.allclose(critic_out, ref_critic, atol=5e-2, rtol=5e-2)

    # TODO(synk): get_action / train / run involve env stepping, Categorical
    # sampling and the Adam optimizer loop — host-side control flow with no
    # Pallas equivalent.
    print("KERNEL_OK")
</pallas_src>

<mosaic_0001>
module attributes {stable_mosaic.version = 11 : i64} {
  func.func @_pg_fused_kernel(%arg0: i32, %arg1: memref<256x8xbf16, #tpu.memory_space<vmem>>, %arg2: memref<8x512xbf16, #tpu.memory_space<vmem>>, %arg3: memref<1x512xf32, #tpu.memory_space<vmem>>, %arg4: memref<512x128xbf16, #tpu.memory_space<vmem>>, %arg5: memref<1x128xf32, #tpu.memory_space<vmem>>, %arg6: memref<256x128xf32, #tpu.memory_space<vmem>>) attributes {dimension_semantics = [#tpu.dimension_semantics<parallel>], iteration_bounds = array<i64: 2>, scalar_prefetch = 0 : i64, scratch_operands = 0 : i64, tpu.core_type = #tpu.core_type<tc>, window_params = [{transform_indices = @transform_0, window_bounds = array<i64: 256, 8>}, {pipeline_mode = #tpu.pipeline_mode<synchronous>, transform_indices = @transform_1, window_bounds = array<i64: 8, 512>}, {pipeline_mode = #tpu.pipeline_mode<synchronous>, transform_indices = @transform_2, window_bounds = array<i64: 1, 512>}, {pipeline_mode = #tpu.pipeline_mode<synchronous>, transform_indices = @transform_3, window_bounds = array<i64: 512, 128>}, {pipeline_mode = #tpu.pipeline_mode<synchronous>, transform_indices = @transform_4, window_bounds = array<i64: 1, 128>}, {transform_indices = @transform_5, window_bounds = array<i64: 256, 128>}]} {
    %c0 = arith.constant 0 : index
    %c0_0 = arith.constant 0 : index
    %0 = vector.load %arg1[%c0, %c0_0] : memref<256x8xbf16, #tpu.memory_space<vmem>>, vector<256x8xbf16>
    %c0_1 = arith.constant 0 : index
    %c0_2 = arith.constant 0 : index
    %1 = vector.load %arg2[%c0_1, %c0_2] : memref<8x512xbf16, #tpu.memory_space<vmem>>, vector<8x512xbf16>
    %cst = arith.constant dense<0.000000e+00> : vector<256x512xf32>
    %2 = tpu.matmul %0, %1, %cst {dimension_numbers = #tpu.dot_dimension_numbers<[1], [0], [0], [1], [0, 0, 1, 1], [], []>} : vector<256x8xbf16>, vector<8x512xbf16>, vector<256x512xf32> -> vector<256x512xf32>
    %c0_3 = arith.constant 0 : index
    %c0_4 = arith.constant 0 : index
    %3 = vector.load %arg3[%c0_3, %c0_4] : memref<1x512xf32, #tpu.memory_space<vmem>>, vector<1x512xf32>
    %4 = vector.broadcast %3 : vector<1x512xf32> to vector<256x512xf32>
    %5 = arith.addf %2, %4 : vector<256x512xf32>
    %cst_5 = arith.constant 0.000000e+00 : f32
    %6 = vector.broadcast %cst_5 : f32 to vector<256x512xf32>
    %7 = arith.maximumf %5, %6 : vector<256x512xf32>
    %8 = arith.truncf %7 : vector<256x512xf32> to vector<256x512xbf16>
    %c0_6 = arith.constant 0 : index
    %c0_7 = arith.constant 0 : index
    %9 = vector.load %arg4[%c0_6, %c0_7] : memref<512x128xbf16, #tpu.memory_space<vmem>>, vector<512x128xbf16>
    %cst_8 = arith.constant dense<0.000000e+00> : vector<256x128xf32>
    %10 = tpu.matmul %8, %9, %cst_8 {dimension_numbers = #tpu.dot_dimension_numbers<[1], [0], [0], [1], [0, 0, 1, 1], [], []>} : vector<256x512xbf16>, vector<512x128xbf16>, vector<256x128xf32> -> vector<256x128xf32>
    %c0_9 = arith.constant 0 : index
    %c0_10 = arith.constant 0 : index
    %11 = vector.load %arg5[%c0_9, %c0_10] : memref<1x128xf32, #tpu.memory_space<vmem>>, vector<1x128xf32>
    %12 = vector.broadcast %11 : vector<1x128xf32> to vector<256x128xf32>
    %13 = arith.addf %10, %12 : vector<256x128xf32>
    %14 = tpu.iota {dimensions = array<i32: 1>} : vector<256x128xi32>
    %c4_i32 = arith.constant 4 : i32
    %15 = vector.broadcast %c4_i32 : i32 to vector<256x128xi32>
    %16 = arith.cmpi slt, %14, %15 : vector<256x128xi32>
    %cst_11 = arith.constant 0xFF800000 : f32
    %17 = vector.broadcast %cst_11 : f32 to vector<256x128xf32>
    %18 = arith.select %16, %13, %17 : vector<256x128xi1>, vector<256x128xf32>
    %cst_12 = arith.constant dense<0xFF800000> : vector<256xf32>
    %19 = vector.multi_reduction <maximumf>, %18, %cst_12 [1] : vector<256x128xf32> to vector<256xf32>
    %20 = vector.shape_cast %19 : vector<256xf32> to vector<256x1xf32>
    %21 = vector.broadcast %20 : vector<256x1xf32> to vector<256x128xf32>
    %22 = arith.subf %18, %21 : vector<256x128xf32>
    %23 = math.exp %22 : vector<256x128xf32>
    %cst_13 = arith.constant dense<0.000000e+00> : vector<256xf32>
    %24 = vector.multi_reduction <add>, %23, %cst_13 [1] : vector<256x128xf32> to vector<256xf32>
    %25 = vector.shape_cast %24 : vector<256xf32> to vector<256x1xf32>
    %26 = vector.broadcast %25 : vector<256x1xf32> to vector<256x128xf32>
    %27 = arith.divf %23, %26 : vector<256x128xf32>
    %28 = arith.select %16, %27, %13 : vector<256x128xi1>, vector<256x128xf32>
    %c0_14 = arith.constant 0 : index
    %c0_15 = arith.constant 0 : index
    %29 = vector.load %arg6[%c0_14, %c0_15] : memref<256x128xf32, #tpu.memory_space<vmem>>, vector<256x128xf32>
    tpu.vector_store %arg6[%c0_14, %c0_15], %28 {strides = array<i32>} : memref<256x128xf32, #tpu.memory_space<vmem>>, vector<256x128xf32>,
    return
  }
  func.func @transform_0(%arg0: i32) -> (i32, i32) {
    %c0_i32 = arith.constant 0 : i32
    %c0_i32_0 = arith.constant 0 : i32
    return %arg0, %c0_i32 : i32, i32
  }
  func.func @transform_1(%arg0: i32) -> (i32, i32) {
    %c0_i32 = arith.constant 0 : i32
    %c0_i32_0 = arith.constant 0 : i32
    %c0_i32_1 = arith.constant 0 : i32
    return %c0_i32, %c0_i32_0 : i32, i32
  }
  func.func @transform_2(%arg0: i32) -> (i32, i32) {
    %c0_i32 = arith.constant 0 : i32
    %c0_i32_0 = arith.constant 0 : i32
    %c0_i32_1 = arith.constant 0 : i32
    return %c0_i32, %c0_i32_0 : i32, i32
  }
  func.func @transform_3(%arg0: i32) -> (i32, i32) {
    %c0_i32 = arith.constant 0 : i32
    %c0_i32_0 = arith.constant 0 : i32
    %c0_i32_1 = arith.constant 0 : i32
    return %c0_i32, %c0_i32_0 : i32, i32
  }
  func.func @transform_4(%arg0: i32) -> (i32, i32) {
    %c0_i32 = arith.constant 0 : i32
    %c0_i32_0 = arith.constant 0 : i32
    %c0_i32_1 = arith.constant 0 : i32
    return %c0_i32, %c0_i32_0 : i32, i32
  }
  func.func @transform_5(%arg0: i32) -> (i32, i32) {
    %c0_i32 = arith.constant 0 : i32
    %c0_i32_0 = arith.constant 0 : i32
    return %arg0, %c0_i32 : i32, i32
  }
}

</mosaic_0001>

<llo_original>
// kernel: policy_gradient_forward.1
$region0: #{policy_gradient_forward.1}
  #allocation0 [shape = 'u32[]', space=smem, size = 0x4, offset = 0x4, fixed_abs, tag = 'smem constant byte address 0x4 - core index']
  #allocation1 [shape = 'u32[144,128]{1,0:T(1,128)}', space=vmem, size = 0x12000, scoped, tag = 'internal scratch']
  %s0 = inlined_call_operand.vmem [shape: bf16[512,8], index: 0, kind: input, shape index: {}]
  %s1 = inlined_call_operand.vmem [shape: bf16[8,512], index: 1, kind: input, shape index: {}]
  %s2 = inlined_call_operand.vmem [shape: f32[1,512], index: 2, kind: input, shape index: {}]
  %s3 = inlined_call_operand.vmem [shape: bf16[512,128], index: 3, kind: input, shape index: {}]
  %s4 = inlined_call_operand.vmem [shape: f32[1,128], index: 4, kind: input, shape index: {}]
  %s5 = inlined_call_operand.vmem [shape: f32[512,128], index: 5, kind: output, shape index: {}]
  %s6 = sld [smem:[#allocation0]]
  $region53: #{policy_gradient_forward.1} parent=0
    _
  %s8 = ssub.s32 1, %s6
  %s9 = scalar_select 0, %s8, %s6
  loop: start=0, step=1, limit=4
  $region2: #{policy_gradient_forward.1} parent=0 // loop_pre_header
    _
  $region3: #{policy_gradient_forward.1} parent=0 // loop_header
    %s11 = sphi 0, %s15
    %p12 = scmp.ge.s32.totalorder %s11, 4
    %s21 = sphi 0, %s23
    %s24 = sphi 0, %s21
    %s25 = sphi 0, %s24
    %s41 = sphi 0, %s25
    %s45 = sphi 0, %s45
    %s47 = sphi 0, %s45
    %s48 = sphi 0, %s47
    %s62 = sphi 0, %s48
    %s66 = sphi 0, %s66
    %s68 = sphi 0, %s66
    %s69 = sphi 0, %s68
    %s83 = sphi 0, %s69
    %s87 = sphi 0, %s87
    %s89 = sphi 0, %s87
    %s90 = sphi 0, %s89
    %s104 = sphi 0, %s90
    %s108 = sphi 0, %s108
    %s110 = sphi 0, %s108
    %s111 = sphi 0, %s110
    %s125 = sphi 0, %s111
    %s131 = sphi 0, %s133
    %s134 = sphi 0, %s131
    %s135 = sphi 0, %s134
    %s151 = sphi 0, %s135
  $region4: #{policy_gradient_forward.1} parent=0 // loop_header_branch
    %14 = sbr.rel (%p12) target = $region8
  $region5: #{policy_gradient_forward.1} parent=0 // loop_body
    %s16 = ssub.s32 %s11, 1
    %s17 = ssub.s32 %s11, 2
    %s18 = sadd.s32 %s11, 1
    %s19 = ssub.s32 %s11, %s18
    %p20 = scmp.eq.s32.totalorder %s19, 0
    %s22 = sadd.s32 %s21, 1
    %s23 = scalar_select %p20, %s21, %s22
    %p26 = pneg %p20
    %p27 = scmp.eq.s32.totalorder %s11, 1
    %p28 = por %p26, %p27
    %p29 = scmp.ne.s32.totalorder %s21, %s24
    %p30 = scmp.eq.s32.totalorder %s11, 0
    %p31 = por %p29, %p30
    %p32 = scmp.ne.s32.totalorder %s21, %s24
    %p33 = scmp.eq.s32.totalorder %s16, 1
    %p34 = por %p32, %p33
    %p35 = scmp.ne.s32.totalorder %s24, %s25
    %p36 = scmp.eq.s32.totalorder %s16, 0
    %p37 = por %p35, %p36
    %p38 = scmp.ne.s32.totalorder %s24, %s25
    %p39 = scmp.eq.s32.totalorder %s17, 1
    %p40 = por %p38, %p39
    %p42 = scmp.ne.s32.totalorder %s25, %s41
    %p43 = scmp.eq.s32.totalorder %s17, 0
    %p44 = por %p42, %p43
    %s46 = sadd.s32 %s45, 1
    %p49 = scmp.eq.s32.totalorder %s11, 1
    %p50 = scmp.ne.s32.totalorder %s45, %s47
    %p51 = scmp.eq.s32.totalorder %s11, 0
    %p52 = por %p50, %p51
    %p53 = scmp.ne.s32.totalorder %s45, %s47
    %p54 = scmp.eq.s32.totalorder %s16, 1
    %p55 = por %p53, %p54
    %p56 = scmp.ne.s32.totalorder %s47, %s48
    %p57 = scmp.eq.s32.totalorder %s16, 0
    %p58 = por %p56, %p57
    %p59 = scmp.ne.s32.totalorder %s47, %s48
    %p60 = scmp.eq.s32.totalorder %s17, 1
    %p61 = por %p59, %p60
    %p63 = scmp.ne.s32.totalorder %s48, %s62
    %p64 = scmp.eq.s32.totalorder %s17, 0
    %p65 = por %p63, %p64
    %s67 = sadd.s32 %s66, 1
    %p70 = scmp.eq.s32.totalorder %s11, 1
    %p71 = scmp.ne.s32.totalorder %s66, %s68
    %p72 = scmp.eq.s32.totalorder %s11, 0
    %p73 = por %p71, %p72
    %p74 = scmp.ne.s32.totalorder %s66, %s68
    %p75 = scmp.eq.s32.totalorder %s16, 1
    %p76 = por %p74, %p75
    %p77 = scmp.ne.s32.totalorder %s68, %s69
    %p78 = scmp.eq.s32.totalorder %s16, 0
    %p79 = por %p77, %p78
    %p80 = scmp.ne.s32.totalorder %s68, %s69
    %p81 = scmp.eq.s32.totalorder %s17, 1
    %p82 = por %p80, %p81
    %p84 = scmp.ne.s32.totalorder %s69, %s83
    %p85 = scmp.eq.s32.totalorder %s17, 0
    %p86 = por %p84, %p85
    %s88 = sadd.s32 %s87, 1
    %p91 = scmp.eq.s32.totalorder %s11, 1
    %p92 = scmp.ne.s32.totalorder %s87, %s89
    %p93 = scmp.eq.s32.totalorder %s11, 0
    %p94 = por %p92, %p93
    %p95 = scmp.ne.s32.totalorder %s87, %s89
    %p96 = scmp.eq.s32.totalorder %s16, 1
    %p97 = por %p95, %p96
    %p98 = scmp.ne.s32.totalorder %s89, %s90
    %p99 = scmp.eq.s32.totalorder %s16, 0
    %p100 = por %p98, %p99
    %p101 = scmp.ne.s32.totalorder %s89, %s90
    %p102 = scmp.eq.s32.totalorder %s17, 1
    %p103 = por %p101, %p102
    %p105 = scmp.ne.s32.totalorder %s90, %s104
    %p106 = scmp.eq.s32.totalorder %s17, 0
    %p107 = por %p105, %p106
    %s109 = sadd.s32 %s108, 1
    %p112 = scmp.eq.s32.totalorder %s11, 1
    %p113 = scmp.ne.s32.totalorder %s108, %s110
    %p114 = scmp.eq.s32.totalorder %s11, 0
    %p115 = por %p113, %p114
    %p116 = scmp.ne.s32.totalorder %s108, %s110
    %p117 = scmp.eq.s32.totalorder %s16, 1
    %p118 = por %p116, %p117
    %p119 = scmp.ne.s32.totalorder %s110, %s111
    %p120 = scmp.eq.s32.totalorder %s16, 0
    %p121 = por %p119, %p120
    %p122 = scmp.ne.s32.totalorder %s110, %s111
    %p123 = scmp.eq.s32.totalorder %s17, 1
    %p124 = por %p122, %p123
    %p126 = scmp.ne.s32.totalorder %s111, %s125
    %p127 = scmp.eq.s32.totalorder %s17, 0
    %p128 = por %p126, %p127
    %s129 = ssub.s32 %s11, %s18
    %p130 = scmp.eq.s32.totalorder %s129, 0
    %s132 = sadd.s32 %s131, 1
    %s133 = scalar_select %p130, %s131, %s132
    %p136 = pneg %p130
    %p137 = scmp.eq.s32.totalorder %s11, 1
    %p138 = por %p136, %p137
    %p139 = scmp.ne.s32.totalorder %s131, %s134
    %p140 = scmp.eq.s32.totalorder %s11, 0
    %p141 = por %p139, %p140
    %p142 = scmp.ne.s32.totalorder %s131, %s134
    %p143 = scmp.eq.s32.totalorder %s16, 1
    %p144 = por %p142, %p143
    %p145 = scmp.ne.s32.totalorder %s134, %s135
    %p146 = scmp.eq.s32.totalorder %s16, 0
    %p147 = por %p145, %p146
    %p148 = scmp.ne.s32.totalorder %s134, %s135
    %p149 = scmp.eq.s32.totalorder %s17, 1
    %p150 = por %p148, %p149
    %p152 = scmp.ne.s32.totalorder %s135, %s151
    %p153 = scmp.eq.s32.totalorder %s17, 0
    %p154 = por %p152, %p153
    %p155 = scmp.le.s32.totalorder 1, %s11
    %p156 = scmp.lt.s32.totalorder %s11, 3
    %p157 = pnand %p155, %p156
    %p158 = pneg %p157
    // Predicated region
    $region9: #{policy_gradient_forward.1} parent=5 // pred_check
      _
    $region10: #{policy_gradient_forward.1} parent=5 // pred_check_branch
      %160 = sbr.rel (%p157) target = $region12
    $region11: #{policy_gradient_forward.1} parent=5 // pred_region
      %s161 = ssub.s32 %s11, 1
      // Predicated region
      $region13: #{policy_gradient_forward.1} parent=11 // pred_check
        %p162 = pneg %p58
      $region14: #{policy_gradient_forward.1} parent=11 // pred_check_branch
        %164 = sbr.rel (%p162) target = $region16
      $region15: #{policy_gradient_forward.1} parent=11 // pred_region
        _
      $region16: #{policy_gradient_forward.1} parent=11 // pred_fallthru
        _
      // Predicated region
      $region17: #{policy_gradient_forward.1} parent=11 // pred_check
        %p165 = pneg %p79
      $region18: #{policy_gradient_forward.1} parent=11 // pred_check_branch
        %167 = sbr.rel (%p165) target = $region20
      $region19: #{policy_gradient_forward.1} parent=11 // pred_region
        _
      $region20: #{policy_gradient_forward.1} parent=11 // pred_fallthru
        _
      // Predicated region
      $region21: #{policy_gradient_forward.1} parent=11 // pred_check
        %p168 = pneg %p100
      $region22: #{policy_gradient_forward.1} parent=11 // pred_check_branch
        %170 = sbr.rel (%p168) target = $region24
      $region23: #{policy_gradient_forward.1} parent=11 // pred_region
        _
      $region24: #{policy_gradient_forward.1} parent=11 // pred_fallthru
        _
      // Predicated region
      $region25: #{policy_gradient_forward.1} parent=11 // pred_check
        %p171 = pneg %p121
      $region26: #{policy_gradient_forward.1} parent=11 // pred_check_branch
        %173 = sbr.rel (%p171) target = $region28
      $region27: #{policy_gradient_forward.1} parent=11 // pred_region
        _
      $region28: #{policy_gradient_forward.1} parent=11 // pred_fallthru
        _
    $region12: #{policy_gradient_forward.1} parent=5 // pred_fallthru
      _
    %p174 = scmp.lt.s32.totalorder %s11, 2
    // Predicated region
    $region29: #{policy_gradient_forward.1} parent=5 // pred_check
      %p175 = pneg %p174
    $region30: #{policy_gradient_forward.1} parent=5 // pred_check_branch
      %177 = sbr.rel (%p175) target = $region32
    $region31: #{policy_gradient_forward.1} parent=5 // pred_region
      // Predicated region
      $region33: #{policy_gradient_forward.1} parent=31 // pred_check
        %p178 = pneg %p31
      $region34: #{policy_gradient_forward.1} parent=31 // pred_check_branch
        %180 = sbr.rel (%p178) target = $region36
      $region35: #{policy_gradient_forward.1} parent=31 // pred_region
        %s181 = smul.u32 32, %s11
        %p182 = scmp.lt.s32.totalorder %s181, 63
        %s183 = scalar_select %p182, %s181, 63
        %s184 = smul.addr %s183, 4
        %s185 = scalar_lea.vmem %s0, %s184
        %s186 = smul.u32 32, %s11
      $region36: #{policy_gradient_forward.1} parent=31 // pred_fallthru
        _
    $region32: #{policy_gradient_forward.1} parent=5 // pred_fallthru
      _
    %p187 = scmp.le.s32.totalorder 1, %s11
    %p188 = scmp.lt.s32.totalorder %s11, 3
    %p189 = pnand %p187, %p188
    %p190 = pneg %p189
    // Predicated region
    $region37: #{policy_gradient_forward.1} parent=5 // pred_check
      _
    $region38: #{policy_gradient_forward.1} parent=5 // pred_check_branch
      %192 = sbr.rel (%p189) target = $region40
    $region39: #{policy_gradient_forward.1} parent=5 // pred_region
      %s193 = ssub.s32 %s11, 1
      %s194 = smul.u32 32, %s16
      %p195 = scmp.lt.s32.totalorder %s194, 63
      %s196 = scalar_select %p195, %s194, 63
      %s197 = smul.addr %s196, 4
      %s198 = scalar_lea.vmem %s0, %s197
      %p199 = pneg %p37
      %p200 = pneg %p34
      %p201 = pneg %p58
      %p202 = pneg %p55
      %p203 = pneg %p79
      %p204 = pneg %p76
      %p205 = pneg %p100
      %p206 = pneg %p97
      %p207 = pneg %p121
      %p208 = pneg %p118
      %p209 = pneg %p147
      %p210 = pneg %p144
      %s211 = smul.u32 32, %s16
      %p212 = scmp.lt.s32.totalorder %s211, 63
      %s213 = scalar_select %p212, %s211, 63
      %s214 = smul.addr %s213, 8
      %s215 = scalar_lea.vmem %s5, %s214
      %s216 = smul.u32 32, %s16
      %p217 = scmp.lt.s32.totalorder %s216, 63
      %s218 = scalar_select %p217, %s216, 63
      %s219 = smul.addr %s218, 4
      %s220 = scalar_lea.vmem %s0, %s219
      %s221 = smul.u32 32, %s16
      %s222 = smul.u32 32, %s16
      %p223 = scmp.lt.s32.totalorder %s222, 63
      %s224 = scalar_select %p223, %s222, 63
      %s225 = smul.addr %s224, 8
      %s226 = scalar_lea.vmem %s5, %s225
      %s227 = smul.u32 32, %s16
      %v229 = vld [vmem:[%s220] sm:$0xf]
      %v230 = vld [vmem:[%s220 + $0x4] sm:$0xf]
      %v231 = vld [vmem:[%s220 + $0x8] sm:$0xf]
      %v232 = vld [vmem:[%s220 + $0xc] sm:$0xf]
      %v233 = vld [vmem:[%s220 + $0x10] sm:$0xf]
      %v234 = vld [vmem:[%s220 + $0x14] sm:$0xf]
      %v235 = vld [vmem:[%s220 + $0x18] sm:$0xf]
      %v236 = vld [vmem:[%s220 + $0x1c] sm:$0xf]
      %v237 = vld [vmem:[%s220 + $0x20] sm:$0xf]
      %v238 = vld [vmem:[%s220 + $0x24] sm:$0xf]
      %v239 = vld [vmem:[%s220 + $0x28] sm:$0xf]
      %v240 = vld [vmem:[%s220 + $0x2c] sm:$0xf]
      %v241 = vld [vmem:[%s220 + $0x30] sm:$0xf]
      %v242 = vld [vmem:[%s220 + $0x34] sm:$0xf]
      %v243 = vld [vmem:[%s220 + $0x38] sm:$0xf]
      %v244 = vld [vmem:[%s220 + $0x3c] sm:$0xf]
      %v245 = vld [vmem:[%s220 + $0x40] sm:$0xf]
      %v246 = vld [vmem:[%s220 + $0x44] sm:$0xf]
      %v247 = vld [vmem:[%s220 + $0x48] sm:$0xf]
      %v248 = vld [vmem:[%s220 + $0x4c] sm:$0xf]
      %v249 = vld [vmem:[%s220 + $0x50] sm:$0xf]
      %v250 = vld [vmem:[%s220 + $0x54] sm:$0xf]
      %v251 = vld [vmem:[%s220 + $0x58] sm:$0xf]
      %v252 = vld [vmem:[%s220 + $0x5c] sm:$0xf]
      %v253 = vld [vmem:[%s220 + $0x60] sm:$0xf]
      %v254 = vld [vmem:[%s220 + $0x64] sm:$0xf]
      %v255 = vld [vmem:[%s220 + $0x68] sm:$0xf]
      %v256 = vld [vmem:[%s220 + $0x6c] sm:$0xf]
      %v257 = vld [vmem:[%s220 + $0x70] sm:$0xf]
      %v258 = vld [vmem:[%s220 + $0x74] sm:$0xf]
      %v259 = vld [vmem:[%s220 + $0x78] sm:$0xf]
      %v260 = vld [vmem:[%s220 + $0x7c] sm:$0xf]
      %v261 = vld [vmem:[%s1] sm:$0xff]
      %v262 = vld [vmem:[%s1 + $0x8] sm:$0xff]
      %v263 = vld [vmem:[%s2] sm:$0xf]
      %v265 = vlaneseq
      %v266 = vshrl.u32 %v265, 7
      %v267 = vsub.s32 0, %v266
      %v268 = vrot.slane %v263, %v267
      %v269 = vlaneseq
      %v270 = vshrl.u32 %v269, 7
      %v271 = vsub.s32 1, %v270
      %v272 = vrot.slane %v263, %v271
      %v273 = vlaneseq
      %v274 = vshrl.u32 %v273, 7
      %v275 = vsub.s32 2, %v274
      %v276 = vrot.slane %v263, %v275
      %v277 = vlaneseq
      %v278 = vshrl.u32 %v277, 7
      %v279 = vsub.s32 3, %v278
      %v280 = vrot.slane %v263, %v279
      %v317 = vunpack.c.l.b16 %v229
      %v318 = vunpack.c.l.b16 %v230
      %v319 = vunpack.c.l.b16 %v231
      %v320 = vunpack.c.l.b16 %v232
      %v321 = vunpack.c.l.b16 %v233
      %v322 = vunpack.c.l.b16 %v234
      %v323 = vunpack.c.l.b16 %v235
      %v324 = vunpack.c.l.b16 %v236
      %v325 = vunpack.c.l.b16 %v237
      %v326 = vunpack.c.l.b16 %v238
      %v327 = vunpack.c.l.b16 %v239
      %v328 = vunpack.c.l.b16 %v240
      %v329 = vunpack.c.l.b16 %v241
      %v330 = vunpack.c.l.b16 %v242
      %v331 = vunpack.c.l.b16 %v243
      %v332 = vunpack.c.l.b16 %v244
      %v333 = vunpack.c.l.b16 %v245
      %v334 = vunpack.c.l.b16 %v246
      %v335 = vunpack.c.l.b16 %v247
      %v336 = vunpack.c.l.b16 %v248
      %v337 = vunpack.c.l.b16 %v249
      %v338 = vunpack.c.l.b16 %v250
      %v339 = vunpack.c.l.b16 %v251
      %v340 = vunpack.c.l.b16 %v252
      %v341 = vunpack.c.l.b16 %v253
      %v342 = vunpack.c.l.b16 %v254
      %v343 = vunpack.c.l.b16 %v255
      %v344 = vunpack.c.l.b16 %v256
      %v345 = vunpack.c.l.b16 %v257
      %v346 = vunpack.c.l.b16 %v258
      %v347 = vunpack.c.l.b16 %v259
      %v348 = vunpack.c.l.b16 %v260
      %v349 = vpack.c.b16 %v318, %v317
      %v350 = vpack.c.b16 %v320, %v319
      %v351 = vpack.c.b16 %v322, %v321
      %v352 = vpack.c.b16 %v324, %v323
      %v353 = vpack.c.b16 %v326, %v325
      %v354 = vpack.c.b16 %v328, %v327
      %v355 = vpack.c.b16 %v330, %v329
      %v356 = vpack.c.b16 %v332, %v331
      %v357 = vpack.c.b16 %v334, %v333
      %v358 = vpack.c.b16 %v336, %v335
      %v359 = vpack.c.b16 %v338, %v337
      %v360 = vpack.c.b16 %v340, %v339
      %v361 = vpack.c.b16 %v342, %v341
      %v362 = vpack.c.b16 %v344, %v343
      %v363 = vpack.c.b16 %v346, %v345
      %v364 = vpack.c.b16 %v348, %v347
      %v367 = vunpack.c.l.b16 %v261
      %v368 = vunpack.c.h.b16 %v261
      %v369 = vunpack.c.l.b16 %v262
      %v370 = vunpack.c.h.b16 %v262
      %v371 = vpack.c.b16 %v367, %v367
      %v372 = vpack.c.b16 %v368, %v368
      %v373 = vpack.c.b16 %v369, %v369
      %v374 = vpack.c.b16 %v370, %v370
      %vm375 = vcmask 64512
      %v377 = vsel %vm375, %v349, 0
      %v380 = vsel %vm375, %v350, 0
      %v383 = vsel %vm375, %v351, 0
      %v386 = vsel %vm375, %v352, 0
      %v389 = vsel %vm375, %v353, 0
      %v392 = vsel %vm375, %v354, 0
      %v395 = vsel %vm375, %v355, 0
      %v398 = vsel %vm375, %v356, 0
      %v401 = vsel %vm375, %v357, 0
      %v404 = vsel %vm375, %v358, 0
      %v407 = vsel %vm375, %v359, 0
      %v410 = vsel %vm375, %v360, 0
      %v413 = vsel %vm375, %v361, 0
      %v416 = vsel %vm375, %v362, 0
      %v419 = vsel %vm375, %v363, 0
      %v422 = vsel %vm375, %v364, 0
      %vm424 = vcmask 1043456
      %v426 = vsel %vm424, %v371, 0
      %v429 = vsel %vm424, %v372, 0
      %v432 = vsel %vm424, %v373, 0
      %v435 = vsel %vm424, %v374, 0
      %437 = vmatprep.subr.bf16.mxu0 %v429
      %438 = vmatpush1.bf16.msra.mxu0 %v426
      %439 = vmatprep.subr.bf16.mxu0 0
      %440 = vmatpush1.bf16.msra.mxu0 0
      %441 = vmatprep.subr.bf16.mxu0 0
      %442 = vmatpush1.bf16.msra.mxu0 0
      %443 = vmatprep.subr.bf16.mxu0 0
      %444 = vmatpush1.bf16.msra.mxu0 0
      %445 = vmatprep.subr.bf16.mxu0 0
      %446 = vmatpush1.bf16.msra.mxu0 0
      %447 = vmatprep.subr.bf16.mxu0 0
      %448 = vmatpush1.bf16.msra.mxu0 0
      %449 = vmatprep.subr.bf16.mxu0 0
      %450 = vmatpush1.bf16.msra.mxu0 0
      %451 = vmatprep.subr.bf16.mxu0 0
      %452 = vmatpush1.bf16.msra.mxu0 0
      %453 = vmatprep.subr.bf16.mxu0 0
      %454 = vmatpush1.bf16.msra.mxu0 0
      %455 = vmatprep.subr.bf16.mxu0 0
      %456 = vmatpush1.bf16.msra.mxu0 0
      %457 = vmatprep.subr.bf16.mxu0 0
      %458 = vmatpush1.bf16.msra.mxu0 0
      %459 = vmatprep.subr.bf16.mxu0 0
      %460 = vmatpush1.bf16.msra.mxu0 0
      %461 = vmatprep.subr.bf16.mxu0 0
      %462 = vmatpush1.bf16.msra.mxu0 0
      %463 = vmatprep.subr.bf16.mxu0 0
      %464 = vmatpush1.bf16.msra.mxu0 0
      %465 = vmatprep.subr.bf16.mxu0 0
      %466 = vmatpush1.bf16.msra.mxu0 0
      %467 = vmatprep.subr.bf16.mxu0 0
      %468 = vmatpush1.bf16.msra.mxu0 0
      %469 = vmatprep.mubr.bf16.mxu0 0
      %470 = vmatmul.mubr.bf16.gmra.mrb[0].mxu0 %v377
      %v471 = vpop.f32.mrb[0].mxu0
      %v472 = vadd.f32 %v268, %v471
      %v473 = vpop.f32.mrb[0].mxu0
      %v474 = vadd.f32 %v272, %v473
      %v475 = vpop.f32.mrb[0].mxu0
      %v476 = vadd.f32 %v268, %v475
      %v477 = vpop.f32.mrb[0].mxu0
      %v478 = vadd.f32 %v272, %v477
      %479 = vmatprep.mubr.bf16.mxu0 0
      %480 = vmatmul.mubr.bf16.gmra.mrb[0].mxu0 %v380
      %v481 = vpop.f32.mrb[0].mxu0
      %v482 = vadd.f32 %v268, %v481
      %v483 = vpop.f32.mrb[0].mxu0
      %v484 = vadd.f32 %v272, %v483
      %v485 = vpop.f32.mrb[0].mxu0
      %v486 = vadd.f32 %v268, %v485
      %v487 = vpop.f32.mrb[0].mxu0
      %v488 = vadd.f32 %v272, %v487
      %489 = vmatprep.mubr.bf16.mxu0 0
      %490 = vmatmul.mubr.bf16.gmra.mrb[0].mxu0 %v383
      %v491 = vpop.f32.mrb[0].mxu0
      %v492 = vadd.f32 %v268, %v491
      %v493 = vpop.f32.mrb[0].mxu0
      %v494 = vadd.f32 %v272, %v493
      %v495 = vpop.f32.mrb[0].mxu0
      %v496 = vadd.f32 %v268, %v495
      %v497 = vpop.f32.mrb[0].mxu0
      %v498 = vadd.f32 %v272, %v497
      %499 = vmatprep.mubr.bf16.mxu0 0
      %500 = vmatmul.mubr.bf16.gmra.mrb[0].mxu0 %v386
      %v501 = vpop.f32.mrb[0].mxu0
      %v502 = vadd.f32 %v268, %v501
      %v503 = vpop.f32.mrb[0].mxu0
      %v504 = vadd.f32 %v272, %v503
      %v505 = vpop.f32.mrb[0].mxu0
      %v506 = vadd.f32 %v268, %v505
      %v507 = vpop.f32.mrb[0].mxu0
      %v508 = vadd.f32 %v272, %v507
      %509 = vmatprep.mubr.bf16.mxu0 0
      %510 = vmatmul.mubr.bf16.gmra.mrb[0].mxu0 %v389
      %v511 = vpop.f32.mrb[0].mxu0
      %v512 = vadd.f32 %v268, %v511
      %v513 = vpop.f32.mrb[0].mxu0
      %v514 = vadd.f32 %v272, %v513
      %v515 = vpop.f32.mrb[0].mxu0
      %v516 = vadd.f32 %v268, %v515
      %v517 = vpop.f32.mrb[0].mxu0
      %v518 = vadd.f32 %v272, %v517
      %519 = vmatprep.mubr.bf16.mxu0 0
      %520 = vmatmul.mubr.bf16.gmra.mrb[0].mxu0 %v392
      %v521 = vpop.f32.mrb[0].mxu0
      %v522 = vadd.f32 %v268, %v521
      %v523 = vpop.f32.mrb[0].mxu0
      %v524 = vadd.f32 %v272, %v523
      %v525 = vpop.f32.mrb[0].mxu0
      %v526 = vadd.f32 %v268, %v525
      %v527 = vpop.f32.mrb[0].mxu0
      %v528 = vadd.f32 %v272, %v527
      %529 = vmatprep.mubr.bf16.mxu0 0
      %530 = vmatmul.mubr.bf16.gmra.mrb[0].mxu0 %v395
      %v531 = vpop.f32.mrb[0].mxu0
      %v532 = vadd.f32 %v268, %v531
      %v533 = vpop.f32.mrb[0].mxu0
      %v534 = vadd.f32 %v272, %v533
      %v535 = vpop.f32.mrb[0].mxu0
      %v536 = vadd.f32 %v268, %v535
      %v537 = vpop.f32.mrb[0].mxu0
      %v538 = vadd.f32 %v272, %v537
      %539 = vmatprep.mubr.bf16.mxu0 0
      %540 = vmatmul.mubr.bf16.gmra.mrb[0].mxu0 %v398
      %v541 = vpop.f32.mrb[0].mxu0
      %v542 = vadd.f32 %v268, %v541
      %v543 = vpop.f32.mrb[0].mxu0
      %v544 = vadd.f32 %v272, %v543
      %v545 = vpop.f32.mrb[0].mxu0
      %v546 = vadd.f32 %v268, %v545
      %v547 = vpop.f32.mrb[0].mxu0
      %v548 = vadd.f32 %v272, %v547
      %549 = vmatprep.mubr.bf16.mxu0 0
      %550 = vmatmul.mubr.bf16.gmra.mrb[0].mxu0 %v401
      %v551 = vpop.f32.mrb[0].mxu0
      %v552 = vadd.f32 %v268, %v551
      %v553 = vpop.f32.mrb[0].mxu0
      %v554 = vadd.f32 %v272, %v553
      %v555 = vpop.f32.mrb[0].mxu0
      %v556 = vadd.f32 %v268, %v555
      %v557 = vpop.f32.mrb[0].mxu0
      %v558 = vadd.f32 %v272, %v557
      %559 = vmatprep.mubr.bf16.mxu0 0
      %560 = vmatmul.mubr.bf16.gmra.mrb[0].mxu0 %v404
      %v561 = vpop.f32.mrb[0].mxu0
      %v562 = vadd.f32 %v268, %v561
      %v563 = vpop.f32.mrb[0].mxu0
      %v564 = vadd.f32 %v272, %v563
      %v565 = vpop.f32.mrb[0].mxu0
      %v566 = vadd.f32 %v268, %v565
      %v567 = vpop.f32.mrb[0].mxu0
      %v568 = vadd.f32 %v272, %v567
      %569 = vmatprep.mubr.bf16.mxu0 0
      %570 = vmatmul.mubr.bf16.gmra.mrb[0].mxu0 %v407
      %v571 = vpop.f32.mrb[0].mxu0
      %v572 = vadd.f32 %v268, %v571
      %v573 = vpop.f32.mrb[0].mxu0
      %v574 = vadd.f32 %v272, %v573
      %v575 = vpop.f32.mrb[0].mxu0
      %v576 = vadd.f32 %v268, %v575
      %v577 = vpop.f32.mrb[0].mxu0
      %v578 = vadd.f32 %v272, %v577
      %579 = vmatprep.mubr.bf16.mxu0 0
      %580 = vmatmul.mubr.bf16.gmra.mrb[0].mxu0 %v410
      %v581 = vpop.f32.mrb[0].mxu0
      %v582 = vadd.f32 %v268, %v581
      %v583 = vpop.f32.mrb[0].mxu0
      %v584 = vadd.f32 %v272, %v583
      %v585 = vpop.f32.mrb[0].mxu0
      %v586 = vadd.f32 %v268, %v585
      %v587 = vpop.f32.mrb[0].mxu0
      %v588 = vadd.f32 %v272, %v587
      %589 = vmatprep.mubr.bf16.mxu0 0
      %590 = vmatmul.mubr.bf16.gmra.mrb[0].mxu0 %v413
      %v591 = vpop.f32.mrb[0].mxu0
      %v592 = vadd.f32 %v268, %v591
      %v593 = vpop.f32.mrb[0].mxu0
      %v594 = vadd.f32 %v272, %v593
      %v595 = vpop.f32.mrb[0].mxu0
      %v596 = vadd.f32 %v268, %v595
      %v597 = vpop.f32.mrb[0].mxu0
      %v598 = vadd.f32 %v272, %v597
      %599 = vmatprep.mubr.bf16.mxu0 0
      %600 = vmatmul.mubr.bf16.gmra.mrb[0].mxu0 %v416
      %v601 = vpop.f32.mrb[0].mxu0
      %v602 = vadd.f32 %v268, %v601
      %v603 = vpop.f32.mrb[0].mxu0
      %v604 = vadd.f32 %v272, %v603
      %v605 = vpop.f32.mrb[0].mxu0
      %v606 = vadd.f32 %v268, %v605
      %v607 = vpop.f32.mrb[0].mxu0
      %v608 = vadd.f32 %v272, %v607
      %609 = vmatprep.mubr.bf16.mxu0 0
      %610 = vmatmul.mubr.bf16.gmra.mrb[0].mxu0 %v419
      %v611 = vpop.f32.mrb[0].mxu0
      %v612 = vadd.f32 %v268, %v611
      %v613 = vpop.f32.mrb[0].mxu0
      %v614 = vadd.f32 %v272, %v613
      %v615 = vpop.f32.mrb[0].mxu0
      %v616 = vadd.f32 %v268, %v615
      %v617 = vpop.f32.mrb[0].mxu0
      %v618 = vadd.f32 %v272, %v617
      %619 = vmatprep.mubr.bf16.mxu0 0
      %620 = vmatmul.mubr.bf16.gmra.mrb[0].mxu0 %v422
      %v621 = vpop.f32.mrb[0].mxu0
      %v622 = vadd.f32 %v268, %v621
      %v623 = vpop.f32.mrb[0].mxu0
      %v624 = vadd.f32 %v272, %v623
      %v625 = vpop.f32.mrb[0].mxu0
      %v626 = vadd.f32 %v268, %v625
      %v627 = vpop.f32.mrb[0].mxu0
      %v628 = vadd.f32 %v272, %v627
      %629 = vdwg.mxu0
      %630 = vmatprep.subr.bf16.mxu0 %v435
      %631 = vmatpush1.bf16.msra.mxu0 %v432
      %632 = vmatprep.subr.bf16.mxu0 0
      %633 = vmatpush1.bf16.msra.mxu0 0
      %634 = vmatprep.subr.bf16.mxu0 0
      %635 = vmatpush1.bf16.msra.mxu0 0
      %636 = vmatprep.subr.bf16.mxu0 0
      %637 = vmatpush1.bf16.msra.mxu0 0
      %638 = vmatprep.subr.bf16.mxu0 0
      %639 = vmatpush1.bf16.msra.mxu0 0
      %640 = vmatprep.subr.bf16.mxu0 0
      %641 = vmatpush1.bf16.msra.mxu0 0
      %642 = vmatprep.subr.bf16.mxu0 0
      %643 = vmatpush1.bf16.msra.mxu0 0
      %644 = vmatprep.subr.bf16.mxu0 0
      %645 = vmatpush1.bf16.msra.mxu0 0
      %646 = vmatprep.subr.bf16.mxu0 0
      %647 = vmatpush1.bf16.msra.mxu0 0
      %648 = vmatprep.subr.bf16.mxu0 0
      %649 = vmatpush1.bf16.msra.mxu0 0
      %650 = vmatprep.subr.bf16.mxu0 0
      %651 = vmatpush1.bf16.msra.mxu0 0
      %652 = vmatprep.subr.bf16.mxu0 0
      %653 = vmatpush1.bf16.msra.mxu0 0
      %654 = vmatprep.subr.bf16.mxu0 0
      %655 = vmatpush1.bf16.msra.mxu0 0
      %656 = vmatprep.subr.bf16.mxu0 0
      %657 = vmatpush1.bf16.msra.mxu0 0
      %658 = vmatprep.subr.bf16.mxu0 0
      %659 = vmatpush1.bf16.msra.mxu0 0
      %660 = vmatprep.subr.bf16.mxu0 0
      %661 = vmatpush1.bf16.msra.mxu0 0
      %662 = vmatprep.mubr.bf16.mxu0 0
      %663 = vmatmul.mubr.bf16.gmra.mrb[0].mxu0 %v377
      %v664 = vpop.f32.mrb[0].mxu0
      %v665 = vadd.f32 %v276, %v664
      %v666 = vpop.f32.mrb[0].mxu0
      %v667 = vadd.f32 %v280, %v666
      %v668 = vpop.f32.mrb[0].mxu0
      %v669 = vadd.f32 %v276, %v668
      %v670 = vpop.f32.mrb[0].mxu0
      %v671 = vadd.f32 %v280, %v670
      %672 = vmatprep.mubr.bf16.mxu0 0
      %673 = vmatmul.mubr.bf16.gmra.mrb[0].mxu0 %v380
      %v674 = vpop.f32.mrb[0].mxu0
      %v675 = vadd.f32 %v276, %v674
      %v676 = vpop.f32.mrb[0].mxu0
      %v677 = vadd.f32 %v280, %v676
      %v678 = vpop.f32.mrb[0].mxu0
      %v679 = vadd.f32 %v276, %v678
      %v680 = vpop.f32.mrb[0].mxu0
      %v681 = vadd.f32 %v280, %v680
      %682 = vmatprep.mubr.bf16.mxu0 0
      %683 = vmatmul.mubr.bf16.gmra.mrb[0].mxu0 %v383
      %v684 = vpop.f32.mrb[0].mxu0
      %v685 = vadd.f32 %v276, %v684
      %v686 = vpop.f32.mrb[0].mxu0
      %v687 = vadd.f32 %v280, %v686
      %v688 = vpop.f32.mrb[0].mxu0
      %v689 = vadd.f32 %v276, %v688
      %v690 = vpop.f32.mrb[0].mxu0
      %v691 = vadd.f32 %v280, %v690
      %692 = vmatprep.mubr.bf16.mxu0 0
      %693 = vmatmul.mubr.bf16.gmra.mrb[0].mxu0 %v386
      %v694 = vpop.f32.mrb[0].mxu0
      %v695 = vadd.f32 %v276, %v694
      %v696 = vpop.f32.mrb[0].mxu0
      %v697 = vadd.f32 %v280, %v696
      %v698 = vpop.f32.mrb[0].mxu0
      %v699 = vadd.f32 %v276, %v698
      %v700 = vpop.f32.mrb[0].mxu0
      %v701 = vadd.f32 %v280, %v700
      %702 = vmatprep.mubr.bf16.mxu0 0
      %703 = vmatmul.mubr.bf16.gmra.mrb[0].mxu0 %v389
      %v704 = vpop.f32.mrb[0].mxu0
      %v705 = vadd.f32 %v276, %v704
      %v706 = vpop.f32.mrb[0].mxu0
      %v707 = vadd.f32 %v280, %v706
      %v708 = vpop.f32.mrb[0].mxu0
      %v709 = vadd.f32 %v276, %v708
      %v710 = vpop.f32.mrb[0].mxu0
      %v711 = vadd.f32 %v280, %v710
      %712 = vmatprep.mubr.bf16.mxu0 0
      %713 = vmatmul.mubr.bf16.gmra.mrb[0].mxu0 %v392
      %v714 = vpop.f32.mrb[0].mxu0
      %v715 = vadd.f32 %v276, %v714
      %v716 = vpop.f32.mrb[0].mxu0
      %v717 = vadd.f32 %v280, %v716
      %v718 = vpop.f32.mrb[0].mxu0
      %v719 = vadd.f32 %v276, %v718
      %v720 = vpop.f32.mrb[0].mxu0
      %v721 = vadd.f32 %v280, %v720
      %722 = vmatprep.mubr.bf16.mxu0 0
      %723 = vmatmul.mubr.bf16.gmra.mrb[0].mxu0 %v395
      %v724 = vpop.f32.mrb[0].mxu0
      %v725 = vadd.f32 %v276, %v724
      %v726 = vpop.f32.mrb[0].mxu0
      %v727 = vadd.f32 %v280, %v726
      %v728 = vpop.f32.mrb[0].mxu0
      %v729 = vadd.f32 %v276, %v728
      %v730 = vpop.f32.mrb[0].mxu0
      %v731 = vadd.f32 %v280, %v730
      %732 = vmatprep.mubr.bf16.mxu0 0
      %733 = vmatmul.mubr.bf16.gmra.mrb[0].mxu0 %v398
      %v734 = vpop.f32.mrb[0].mxu0
      %v735 = vadd.f32 %v276, %v734
      %v736 = vpop.f32.mrb[0].mxu0
      %v737 = vadd.f32 %v280, %v736
      %v738 = vpop.f32.mrb[0].mxu0
      %v739 = vadd.f32 %v276, %v738
      %v740 = vpop.f32.mrb[0].mxu0
      %v741 = vadd.f32 %v280, %v740
      %742 = vmatprep.mubr.bf16.mxu0 0
      %743 = vmatmul.mubr.bf16.gmra.mrb[0].mxu0 %v401
      %v744 = vpop.f32.mrb[0].mxu0
      %v745 = vadd.f32 %v276, %v744
      %v746 = vpop.f32.mrb[0].mxu0
      %v747 = vadd.f32 %v280, %v746
      %v748 = vpop.f32.mrb[0].mxu0
      %v749 = vadd.f32 %v276, %v748
      %v750 = vpop.f32.mrb[0].mxu0
      %v751 = vadd.f32 %v280, %v750
      %752 = vmatprep.mubr.bf16.mxu0 0
      %753 = vmatmul.mubr.bf16.gmra.mrb[0].mxu0 %v404
      %v754 = vpop.f32.mrb[0].mxu0
      %v755 = vadd.f32 %v276, %v754
      %v756 = vpop.f32.mrb[0].mxu0
      %v757 = vadd.f32 %v280, %v756
      %v758 = vpop.f32.mrb[0].mxu0
      %v759 = vadd.f32 %v276, %v758
      %v760 = vpop.f32.mrb[0].mxu0
      %v761 = vadd.f32 %v280, %v760
      %762 = vmatprep.mubr.bf16.mxu0 0
      %763 = vmatmul.mubr.bf16.gmra.mrb[0].mxu0 %v407
      %v764 = vpop.f32.mrb[0].mxu0
      %v765 = vadd.f32 %v276, %v764
      %v766 = vpop.f32.mrb[0].mxu0
      %v767 = vadd.f32 %v280, %v766
      %v768 = vpop.f32.mrb[0].mxu0
      %v769 = vadd.f32 %v276, %v768
      %v770 = vpop.f32.mrb[0].mxu0
      %v771 = vadd.f32 %v280, %v770
      %772 = vmatprep.mubr.bf16.mxu0 0
      %773 = vmatmul.mubr.bf16.gmra.mrb[0].mxu0 %v410
      %v774 = vpop.f32.mrb[0].mxu0
      %v775 = vadd.f32 %v276, %v774
      %v776 = vpop.f32.mrb[0].mxu0
      %v777 = vadd.f32 %v280, %v776
      %v778 = vpop.f32.mrb[0].mxu0
      %v779 = vadd.f32 %v276, %v778
      %v780 = vpop.f32.mrb[0].mxu0
      %v781 = vadd.f32 %v280, %v780
      %782 = vmatprep.mubr.bf16.mxu0 0
      %783 = vmatmul.mubr.bf16.gmra.mrb[0].mxu0 %v413
      %v784 = vpop.f32.mrb[0].mxu0
      %v785 = vadd.f32 %v276, %v784
      %v786 = vpop.f32.mrb[0].mxu0
      %v787 = vadd.f32 %v280, %v786
      %v788 = vpop.f32.mrb[0].mxu0
      %v789 = vadd.f32 %v276, %v788
      %v790 = vpop.f32.mrb[0].mxu0
      %v791 = vadd.f32 %v280, %v790
      %792 = vmatprep.mubr.bf16.mxu0 0
      %793 = vmatmul.mubr.bf16.gmra.mrb[0].mxu0 %v416
      %v794 = vpop.f32.mrb[0].mxu0
      %v795 = vadd.f32 %v276, %v794
      %v796 = vpop.f32.mrb[0].mxu0
      %v797 = vadd.f32 %v280, %v796
      %v798 = vpop.f32.mrb[0].mxu0
      %v799 = vadd.f32 %v276, %v798
      %v800 = vpop.f32.mrb[0].mxu0
      %v801 = vadd.f32 %v280, %v800
      %802 = vmatprep.mubr.bf16.mxu0 0
      %803 = vmatmul.mubr.bf16.gmra.mrb[0].mxu0 %v419
      %v804 = vpop.f32.mrb[0].mxu0
      %v805 = vadd.f32 %v276, %v804
      %v806 = vpop.f32.mrb[0].mxu0
      %v807 = vadd.f32 %v280, %v806
      %v808 = vpop.f32.mrb[0].mxu0
      %v809 = vadd.f32 %v276, %v808
      %v810 = vpop.f32.mrb[0].mxu0
      %v811 = vadd.f32 %v280, %v810
      %812 = vmatprep.mubr.bf16.mxu0 0
      %813 = vmatmul.mubr.bf16.gmra.mrb[0].mxu0 %v422
      %v814 = vpop.f32.mrb[0].mxu0
      %v815 = vadd.f32 %v276, %v814
      %v816 = vpop.f32.mrb[0].mxu0
      %v817 = vadd.f32 %v280, %v816
      %v818 = vpop.f32.mrb[0].mxu0
      %v819 = vadd.f32 %v276, %v818
      %v820 = vpop.f32.mrb[0].mxu0
      %v821 = vadd.f32 %v280, %v820
      %822 = vdwg.mxu0
      %v823 = vmax.f32 %v472, 0.0
      %v824 = vmax.f32 %v474, 0.0
      %v825 = vmax.f32 %v665, 0.0
      %v826 = vmax.f32 %v667, 0.0
      %v827 = vmax.f32 %v476, 0.0
      %v828 = vmax.f32 %v478, 0.0
      %v829 = vmax.f32 %v669, 0.0
      %v830 = vmax.f32 %v671, 0.0
      %v831 = vmax.f32 %v482, 0.0
      %v832 = vmax.f32 %v484, 0.0
      %v833 = vmax.f32 %v675, 0.0
      %v834 = vmax.f32 %v677, 0.0
      %v835 = vmax.f32 %v486, 0.0
      %v836 = vmax.f32 %v488, 0.0
      %v837 = vmax.f32 %v679, 0.0
      %v838 = vmax.f32 %v681, 0.0
      %v839 = vmax.f32 %v492, 0.0
      %v840 = vmax.f32 %v494, 0.0
      %v841 = vmax.f32 %v685, 0.0
      %v842 = vmax.f32 %v687, 0.0
      %v843 = vmax.f32 %v496, 0.0
      %v844 = vmax.f32 %v498, 0.0
      %v845 = vmax.f32 %v689, 0.0
      %v846 = vmax.f32 %v691, 0.0
      %v847 = vmax.f32 %v502, 0.0
      %v848 = vmax.f32 %v504, 0.0
      %v849 = vmax.f32 %v695, 0.0
      %v850 = vmax.f32 %v697, 0.0
      %v851 = vmax.f32 %v506, 0.0
      %v852 = vmax.f32 %v508, 0.0
      %v853 = vmax.f32 %v699, 0.0
      %v854 = vmax.f32 %v701, 0.0
      %v855 = vmax.f32 %v512, 0.0
      %v856 = vmax.f32 %v514, 0.0
      %v857 = vmax.f32 %v705, 0.0
      %v858 = vmax.f32 %v707, 0.0
      %v859 = vmax.f32 %v516, 0.0
      %v860 = vmax.f32 %v518, 0.0
      %v861 = vmax.f32 %v709, 0.0
      %v862 = vmax.f32 %v711, 0.0
      %v863 = vmax.f32 %v522, 0.0
      %v864 = vmax.f32 %v524, 0.0
      %v865 = vmax.f32 %v715, 0.0
      %v866 = vmax.f32 %v717, 0.0
      %v867 = vmax.f32 %v526, 0.0
      %v868 = vmax.f32 %v528, 0.0
      %v869 = vmax.f32 %v719, 0.0
      %v870 = vmax.f32 %v721, 0.0
      %v871 = vmax.f32 %v532, 0.0
      %v872 = vmax.f32 %v534, 0.0
      %v873 = vmax.f32 %v725, 0.0
      %v874 = vmax.f32 %v727, 0.0
      %v875 = vmax.f32 %v536, 0.0
      %v876 = vmax.f32 %v538, 0.0
      %v877 = vmax.f32 %v729, 0.0
      %v878 = vmax.f32 %v731, 0.0
      %v879 = vmax.f32 %v542, 0.0
      %v880 = vmax.f32 %v544, 0.0
      %v881 = vmax.f32 %v735, 0.0
      %v882 = vmax.f32 %v737, 0.0
      %v883 = vmax.f32 %v546, 0.0
      %v884 = vmax.f32 %v548, 0.0
      %v885 = vmax.f32 %v739, 0.0
      %v886 = vmax.f32 %v741, 0.0
      %v887 = vmax.f32 %v552, 0.0
      %v888 = vmax.f32 %v554, 0.0
      %v889 = vmax.f32 %v745, 0.0
      %v890 = vmax.f32 %v747, 0.0
      %v891 = vmax.f32 %v556, 0.0
      %v892 = vmax.f32 %v558, 0.0
      %v893 = vmax.f32 %v749, 0.0
      %v894 = vmax.f32 %v751, 0.0
      %v895 = vmax.f32 %v562, 0.0
      %v896 = vmax.f32 %v564, 0.0
      %v897 = vmax.f32 %v755, 0.0
      %v898 = vmax.f32 %v757, 0.0
      %v899 = vmax.f32 %v566, 0.0
      %v900 = vmax.f32 %v568, 0.0
      %v901 = vmax.f32 %v759, 0.0
      %v902 = vmax.f32 %v761, 0.0
      %v903 = vmax.f32 %v572, 0.0
      %v904 = vmax.f32 %v574, 0.0
      %v905 = vmax.f32 %v765, 0.0
      %v906 = vmax.f32 %v767, 0.0
      %v907 = vmax.f32 %v576, 0.0
      %v908 = vmax.f32 %v578, 0.0
      %v909 = vmax.f32 %v769, 0.0
      %v910 = vmax.f32 %v771, 0.0
      %v911 = vmax.f32 %v582, 0.0
      %v912 = vmax.f32 %v584, 0.0
      %v913 = vmax.f32 %v775, 0.0
      %v914 = vmax.f32 %v777, 0.0
      %v915 = vmax.f32 %v586, 0.0
      %v916 = vmax.f32 %v588, 0.0
      %v917 = vmax.f32 %v779, 0.0
      %v918 = vmax.f32 %v781, 0.0
      %v919 = vmax.f32 %v592, 0.0
      %v920 = vmax.f32 %v594, 0.0
      %v921 = vmax.f32 %v785, 0.0
      %v922 = vmax.f32 %v787, 0.0
      %v923 = vmax.f32 %v596, 0.0
      %v924 = vmax.f32 %v598, 0.0
      %v925 = vmax.f32 %v789, 0.0
      %v926 = vmax.f32 %v791, 0.0
      %v927 = vmax.f32 %v602, 0.0
      %v928 = vmax.f32 %v604, 0.0
      %v929 = vmax.f32 %v795, 0.0
      %v930 = vmax.f32 %v797, 0.0
      %v931 = vmax.f32 %v606, 0.0
      %v932 = vmax.f32 %v608, 0.0
      %v933 = vmax.f32 %v799, 0.0
      %v934 = vmax.f32 %v801, 0.0
      %v935 = vmax.f32 %v612, 0.0
      %v936 = vmax.f32 %v614, 0.0
      %v937 = vmax.f32 %v805, 0.0
      %v938 = vmax.f32 %v807, 0.0
      %v939 = vmax.f32 %v616, 0.0
      %v940 = vmax.f32 %v618, 0.0
      %v941 = vmax.f32 %v809, 0.0
      %v942 = vmax.f32 %v811, 0.0
      %v943 = vmax.f32 %v622, 0.0
      %v944 = vmax.f32 %v624, 0.0
      %v945 = vmax.f32 %v815, 0.0
      %v946 = vmax.f32 %v817, 0.0
      %v947 = vmax.f32 %v626, 0.0
      %v948 = vmax.f32 %v628, 0.0
      %v949 = vmax.f32 %v819, 0.0
      %v950 = vmax.f32 %v821, 0.0
      %v951 = vpack.c.bf16 %v827, %v823
      %v952 = vpack.c.bf16 %v828, %v824
      %v953 = vpack.c.bf16 %v829, %v825
      %v954 = vpack.c.bf16 %v830, %v826
      %v955 = vpack.c.bf16 %v835, %v831
      %v956 = vpack.c.bf16 %v836, %v832
      %v957 = vpack.c.bf16 %v837, %v833
      %v958 = vpack.c.bf16 %v838, %v834
      %v959 = vpack.c.bf16 %v843, %v839
      %v960 = vpack.c.bf16 %v844, %v840
      %v961 = vpack.c.bf16 %v845, %v841
      %v962 = vpack.c.bf16 %v846, %v842
      %v963 = vpack.c.bf16 %v851, %v847
      %v964 = vpack.c.bf16 %v852, %v848
      %v965 = vpack.c.bf16 %v853, %v849
      %v966 = vpack.c.bf16 %v854, %v850
      %v967 = vpack.c.bf16 %v859, %v855
      %v968 = vpack.c.bf16 %v860, %v856
      %v969 = vpack.c.bf16 %v861, %v857
      %v970 = vpack.c.bf16 %v862, %v858
      %v971 = vpack.c.bf16 %v867, %v863
      %v972 = vpack.c.bf16 %v868, %v864
      %v973 = vpack.c.bf16 %v869, %v865
      %v974 = vpack.c.bf16 %v870, %v866
      %v975 = vpack.c.bf16 %v875, %v871
      %v976 = vpack.c.bf16 %v876, %v872
      %v977 = vpack.c.bf16 %v877, %v873
      %v978 = vpack.c.bf16 %v878, %v874
      %v979 = vpack.c.bf16 %v883, %v879
      %v980 = vpack.c.bf16 %v884, %v880
      %v981 = vpack.c.bf16 %v885, %v881
      %v982 = vpack.c.bf16 %v886, %v882
      %v983 = vpack.c.bf16 %v891, %v887
      %v984 = vpack.c.bf16 %v892, %v888
      %v985 = vpack.c.bf16 %v893, %v889
      %v986 = vpack.c.bf16 %v894, %v890
      %v987 = vpack.c.bf16 %v899, %v895
      %v988 = vpack.c.bf16 %v900, %v896
      %v989 = vpack.c.bf16 %v901, %v897
      %v990 = vpack.c.bf16 %v902, %v898
      %v991 = vpack.c.bf16 %v907, %v903
      %v992 = vpack.c.bf16 %v908, %v904
      %v993 = vpack.c.bf16 %v909, %v905
      %v994 = vpack.c.bf16 %v910, %v906
      %v995 = vpack.c.bf16 %v915, %v911
      %v996 = vpack.c.bf16 %v916, %v912
      %v997 = vpack.c.bf16 %v917, %v913
      %v998 = vpack.c.bf16 %v918, %v914
      %v999 = vpack.c.bf16 %v923, %v919
      %v1000 = vpack.c.bf16 %v924, %v920
      %v1001 = vpack.c.bf16 %v925, %v921
      %v1002 = vpack.c.bf16 %v926, %v922
      %v1003 = vpack.c.bf16 %v931, %v927
      %v1004 = vpack.c.bf16 %v932, %v928
      %v1005 = vpack.c.bf16 %v933, %v929
      %v1006 = vpack.c.bf16 %v934, %v930
      %v1007 = vpack.c.bf16 %v939, %v935
      %v1008 = vpack.c.bf16 %v940, %v936
      %v1009 = vpack.c.bf16 %v941, %v937
      %v1010 = vpack.c.bf16 %v942, %v938
      %v1011 = vpack.c.bf16 %v947, %v943
      %v1012 = vpack.c.bf16 %v948, %v944
      %v1013 = vpack.c.bf16 %v949, %v945
      %v1014 = vpack.c.bf16 %v950, %v946
      %v1015 = vld [vmem:[%s3] sm:$0xf]
      %v1016 = vld [vmem:[%s3 + $0x4] sm:$0xf]
      %v1017 = vld [vmem:[%s3 + $0x8] sm:$0xf]
      %v1018 = vld [vmem:[%s3 + $0xc] sm:$0xf]
      %v1019 = vld [vmem:[%s3 + $0x10] sm:$0xf]
      %v1020 = vld [vmem:[%s3 + $0x14] sm:$0xf]
      %v1021 = vld [vmem:[%s3 + $0x18] sm:$0xf]
      %v1022 = vld [vmem:[%s3 + $0x1c] sm:$0xf]
      %v1023 = vld [vmem:[%s3 + $0x20] sm:$0xf]
      %v1024 = vld [vmem:[%s3 + $0x24] sm:$0xf]
      %v1025 = vld [vmem:[%s3 + $0x28] sm:$0xf]
      %v1026 = vld [vmem:[%s3 + $0x2c] sm:$0xf]
      %v1027 = vld [vmem:[%s3 + $0x30] sm:$0xf]
      %v1028 = vld [vmem:[%s3 + $0x34] sm:$0xf]
      %v1029 = vld [vmem:[%s3 + $0x38] sm:$0xf]
      %v1030 = vld [vmem:[%s3 + $0x3c] sm:$0xf]
      %v1031 = vld [vmem:[%s3 + $0x40] sm:$0xf]
      %v1032 = vld [vmem:[%s3 + $0x44] sm:$0xf]
      %v1033 = vld [vmem:[%s3 + $0x48] sm:$0xf]
      %v1034 = vld [vmem:[%s3 + $0x4c] sm:$0xf]
      %v1035 = vld [vmem:[%s3 + $0x50] sm:$0xf]
      %v1036 = vld [vmem:[%s3 + $0x54] sm:$0xf]
      %v1037 = vld [vmem:[%s3 + $0x58] sm:$0xf]
      %v1038 = vld [vmem:[%s3 + $0x5c] sm:$0xf]
      %v1039 = vld [vmem:[%s3 + $0x60] sm:$0xf]
      %v1040 = vld [vmem:[%s3 + $0x64] sm:$0xf]
      %v1041 = vld [vmem:[%s3 + $0x68] sm:$0xf]
      %v1042 = vld [vmem:[%s3 + $0x6c] sm:$0xf]
      %v1043 = vld [vmem:[%s3 + $0x70] sm:$0xf]
      %v1044 = vld [vmem:[%s3 + $0x74] sm:$0xf]
      %v1045 = vld [vmem:[%s3 + $0x78] sm:$0xf]
      %v1046 = vld [vmem:[%s3 + $0x7c] sm:$0xf]
      %v1047 = vld [vmem:[%s3 + $0x80] sm:$0xf]
      %v1048 = vld [vmem:[%s3 + $0x84] sm:$0xf]
      %v1049 = vld [vmem:[%s3 + $0x88] sm:$0xf]
      %v1050 = vld [vmem:[%s3 + $0x8c] sm:$0xf]
      %v1051 = vld [vmem:[%s3 + $0x90] sm:$0xf]
      %v1052 = vld [vmem:[%s3 + $0x94] sm:$0xf]
      %v1053 = vld [vmem:[%s3 + $0x98] sm:$0xf]
      %v1054 = vld [vmem:[%s3 + $0x9c] sm:$0xf]
      %v1055 = vld [vmem:[%s3 + $0xa0] sm:$0xf]
      %v1056 = vld [vmem:[%s3 + $0xa4] sm:$0xf]
      %v1057 = vld [vmem:[%s3 + $0xa8] sm:$0xf]
      %v1058 = vld [vmem:[%s3 + $0xac] sm:$0xf]
      %v1059 = vld [vmem:[%s3 + $0xb0] sm:$0xf]
      %v1060 = vld [vmem:[%s3 + $0xb4] sm:$0xf]
      %v1061 = vld [vmem:[%s3 + $0xb8] sm:$0xf]
      %v1062 = vld [vmem:[%s3 + $0xbc] sm:$0xf]
      %v1063 = vld [vmem:[%s3 + $0xc0] sm:$0xf]
      %v1064 = vld [vmem:[%s3 + $0xc4] sm:$0xf]
      %v1065 = vld [vmem:[%s3 + $0xc8] sm:$0xf]
      %v1066 = vld [vmem:[%s3 + $0xcc] sm:$0xf]
      %v1067 = vld [vmem:[%s3 + $0xd0] sm:$0xf]
      %v1068 = vld [vmem:[%s3 + $0xd4] sm:$0xf]
      %v1069 = vld [vmem:[%s3 + $0xd8] sm:$0xf]
      %v1070 = vld [vmem:[%s3 + $0xdc] sm:$0xf]
      %v1071 = vld [vmem:[%s3 + $0xe0] sm:$0xf]
      %v1072 = vld [vmem:[%s3 + $0xe4] sm:$0xf]
      %v1073 = vld [vmem:[%s3 + $0xe8] sm:$0xf]
      %v1074 = vld [vmem:[%s3 + $0xec] sm:$0xf]
      %v1075 = vld [vmem:[%s3 + $0xf0] sm:$0xf]
      %v1076 = vld [vmem:[%s3 + $0xf4] sm:$0xf]
      %v1077 = vld [vmem:[%s3 + $0xf8] sm:$0xf]
      %v1078 = vld [vmem:[%s3 + $0xfc] sm:$0xf]
      %v1079 = vld [vmem:[%s4] sm:$0x1]
      %v1081 = vlaneseq
      %v1082 = vshrl.u32 %v1081, 7
      %v1083 = vsub.s32 0, %v1082
      %v1084 = vrot.slane %v1079, %v1083
      %v1150 = vunpack.c.l.b16 %v1015
      %v1151 = vunpack.c.l.b16 %v1016
      %v1152 = vunpack.c.l.b16 %v1017
      %v1153 = vunpack.c.l.b16 %v1018
      %v1154 = vunpack.c.l.b16 %v1019
      %v1155 = vunpack.c.l.b16 %v1020
      %v1156 = vunpack.c.l.b16 %v1021
      %v1157 = vunpack.c.l.b16 %v1022
      %v1158 = vunpack.c.l.b16 %v1023
      %v1159 = vunpack.c.l.b16 %v1024
      %v1160 = vunpack.c.l.b16 %v1025
      %v1161 = vunpack.c.l.b16 %v1026
      %v1162 = vunpack.c.l.b16 %v1027
      %v1163 = vunpack.c.l.b16 %v1028
      %v1164 = vunpack.c.l.b16 %v1029
      %v1165 = vunpack.c.l.b16 %v1030
      %v1166 = vunpack.c.l.b16 %v1031
      %v1167 = vunpack.c.l.b16 %v1032
      %v1168 = vunpack.c.l.b16 %v1033
      %v1169 = vunpack.c.l.b16 %v1034
      %v1170 = vunpack.c.l.b16 %v1035
      %v1171 = vunpack.c.l.b16 %v1036
      %v1172 = vunpack.c.l.b16 %v1037
      %v1173 = vunpack.c.l.b16 %v1038
      %v1174 = vunpack.c.l.b16 %v1039
      %v1175 = vunpack.c.l.b16 %v1040
      %v1176 = vunpack.c.l.b16 %v1041
      %v1177 = vunpack.c.l.b16 %v1042
      %v1178 = vunpack.c.l.b16 %v1043
      %v1179 = vunpack.c.l.b16 %v1044
      %v1180 = vunpack.c.l.b16 %v1045
      %v1181 = vunpack.c.l.b16 %v1046
      %v1182 = vunpack.c.l.b16 %v1047
      %v1183 = vunpack.c.l.b16 %v1048
      %v1184 = vunpack.c.l.b16 %v1049
      %v1185 = vunpack.c.l.b16 %v1050
      %v1186 = vunpack.c.l.b16 %v1051
      %v1187 = vunpack.c.l.b16 %v1052
      %v1188 = vunpack.c.l.b16 %v1053
      %v1189 = vunpack.c.l.b16 %v1054
      %v1190 = vunpack.c.l.b16 %v1055
      %v1191 = vunpack.c.l.b16 %v1056
      %v1192 = vunpack.c.l.b16 %v1057
      %v1193 = vunpack.c.l.b16 %v1058
      %v1194 = vunpack.c.l.b16 %v1059
      %v1195 = vunpack.c.l.b16 %v1060
      %v1196 = vunpack.c.l.b16 %v1061
      %v1197 = vunpack.c.l.b16 %v1062
      %v1198 = vunpack.c.l.b16 %v1063
      %v1199 = vunpack.c.l.b16 %v1064
      %v1200 = vunpack.c.l.b16 %v1065
      %v1201 = vunpack.c.l.b16 %v1066
      %v1202 = vunpack.c.l.b16 %v1067
      %v1203 = vunpack.c.l.b16 %v1068
      %v1204 = vunpack.c.l.b16 %v1069
      %v1205 = vunpack.c.l.b16 %v1070
      %v1206 = vunpack.c.l.b16 %v1071
      %v1207 = vunpack.c.l.b16 %v1072
      %v1208 = vunpack.c.l.b16 %v1073
      %v1209 = vunpack.c.l.b16 %v1074
      %v1210 = vunpack.c.l.b16 %v1075
      %v1211 = vunpack.c.l.b16 %v1076
      %v1212 = vunpack.c.l.b16 %v1077
      %v1213 = vunpack.c.l.b16 %v1078
      %v1214 = vpack.c.b16 %v1151, %v1150
      %v1215 = vpack.c.b16 %v1153, %v1152
      %v1216 = vpack.c.b16 %v1155, %v1154
      %v1217 = vpack.c.b16 %v1157, %v1156
      %v1218 = vpack.c.b16 %v1159, %v1158
      %v1219 = vpack.c.b16 %v1161, %v1160
      %v1220 = vpack.c.b16 %v1163, %v1162
      %v1221 = vpack.c.b16 %v1165, %v1164
      %v1222 = vpack.c.b16 %v1167, %v1166
      %v1223 = vpack.c.b16 %v1169, %v1168
      %v1224 = vpack.c.b16 %v1171, %v1170
      %v1225 = vpack.c.b16 %v1173, %v1172
      %v1226 = vpack.c.b16 %v1175, %v1174
      %v1227 = vpack.c.b16 %v1177, %v1176
      %v1228 = vpack.c.b16 %v1179, %v1178
      %v1229 = vpack.c.b16 %v1181, %v1180
      %v1230 = vpack.c.b16 %v1183, %v1182
      %v1231 = vpack.c.b16 %v1185, %v1184
      %v1232 = vpack.c.b16 %v1187, %v1186
      %v1233 = vpack.c.b16 %v1189, %v1188
      %v1234 = vpack.c.b16 %v1191, %v1190
      %v1235 = vpack.c.b16 %v1193, %v1192
      %v1236 = vpack.c.b16 %v1195, %v1194
      %v1237 = vpack.c.b16 %v1197, %v1196
      %v1238 = vpack.c.b16 %v1199, %v1198
      %v1239 = vpack.c.b16 %v1201, %v1200
      %v1240 = vpack.c.b16 %v1203, %v1202
      %v1241 = vpack.c.b16 %v1205, %v1204
      %v1242 = vpack.c.b16 %v1207, %v1206
      %v1243 = vpack.c.b16 %v1209, %v1208
      %v1244 = vpack.c.b16 %v1211, %v1210
      %v1245 = vpack.c.b16 %v1213, %v1212
      %1278 = vmatprep.subr.bf16.mxu0 0
      %1279 = vmatpush1.bf16.msra.mxu0 %v1214
      %1280 = vmatprep.subr.bf16.mxu0 0
      %1281 = vmatpush1.bf16.msra.mxu0 %v1215
      %1282 = vmatprep.subr.bf16.mxu0 0
      %1283 = vmatpush1.bf16.msra.mxu0 %v1216
      %1284 = vmatprep.subr.bf16.mxu0 0
      %1285 = vmatpush1.bf16.msra.mxu0 %v1217
      %1286 = vmatprep.subr.bf16.mxu0 0
      %1287 = vmatpush1.bf16.msra.mxu0 %v1218
      %1288 = vmatprep.subr.bf16.mxu0 0
      %1289 = vmatpush1.bf16.msra.mxu0 %v1219
      %1290 = vmatprep.subr.bf16.mxu0 0
      %1291 = vmatpush1.bf16.msra.mxu0 %v1220
      %1292 = vmatprep.subr.bf16.mxu0 0
      %1293 = vmatpush1.bf16.msra.mxu0 %v1221
      %1294 = vmatprep.subr.bf16.mxu0 0
      %1295 = vmatpush1.bf16.msra.mxu0 %v1222
      %1296 = vmatprep.subr.bf16.mxu0 0
      %1297 = vmatpush1.bf16.msra.mxu0 %v1223
      %1298 = vmatprep.subr.bf16.mxu0 0
      %1299 = vmatpush1.bf16.msra.mxu0 %v1224
      %1300 = vmatprep.subr.bf16.mxu0 0
      %1301 = vmatpush1.bf16.msra.mxu0 %v1225
      %1302 = vmatprep.subr.bf16.mxu0 0
      %1303 = vmatpush1.bf16.msra.mxu0 %v1226
      %1304 = vmatprep.subr.bf16.mxu0 0
      %1305 = vmatpush1.bf16.msra.mxu0 %v1227
      %1306 = vmatprep.subr.bf16.mxu0 0
      %1307 = vmatpush1.bf16.msra.mxu0 %v1228
      %1308 = vmatprep.subr.bf16.mxu0 0
      %1309 = vmatpush1.bf16.msra.mxu0 %v1229
      %1310 = vmatprep.mubr.bf16.mxu0 %v952
      %1311 = vmatmul.mubr.bf16.gmra.mrb[0].mxu0 %v951
      %v1312 = vpop.f32.mrb[0].mxu0
      %v1313 = vadd.f32 %v1084, %v1312
      %v1314 = vpop.f32.mrb[0].mxu0
      %v1315 = vpop.f32.mrb[0].mxu0
      %v1316 = vadd.f32 %v1084, %v1315
      %v1317 = vpop.f32.mrb[0].mxu0
      %1318 = vmatprep.mubr.bf16.mxu0 %v956
      %1319 = vmatmul.mubr.bf16.gmra.mrb[0].mxu0 %v955
      %v1320 = vpop.f32.mrb[0].mxu0
      %v1321 = vadd.f32 %v1084, %v1320
      %v1322 = vpop.f32.mrb[0].mxu0
      %v1323 = vpop.f32.mrb[0].mxu0
      %v1324 = vadd.f32 %v1084, %v1323
      %v1325 = vpop.f32.mrb[0].mxu0
      %1326 = vmatprep.mubr.bf16.mxu0 %v960
      %1327 = vmatmul.mubr.bf16.gmra.mrb[0].mxu0 %v959
      %v1328 = vpop.f32.mrb[0].mxu0
      %v1329 = vadd.f32 %v1084, %v1328
      %v1330 = vpop.f32.mrb[0].mxu0
      %v1331 = vpop.f32.mrb[0].mxu0
      %v1332 = vadd.f32 %v1084, %v1331
      %v1333 = vpop.f32.mrb[0].mxu0
      %1334 = vmatprep.mubr.bf16.mxu0 %v964
      %1335 = vmatmul.mubr.bf16.gmra.mrb[0].mxu0 %v963
      %v1336 = vpop.f32.mrb[0].mxu0
      %v1337 = vadd.f32 %v1084, %v1336
      %v1338 = vpop.f32.mrb[0].mxu0
      %v1339 = vpop.f32.mrb[0].mxu0
      %v1340 = vadd.f32 %v1084, %v1339
      %v1341 = vpop.f32.mrb[0].mxu0
      %1342 = vmatprep.mubr.bf16.mxu0 %v968
      %1343 = vmatmul.mubr.bf16.gmra.mrb[0].mxu0 %v967
      %v1344 = vpop.f32.mrb[0].mxu0
      %v1345 = vadd.f32 %v1084, %v1344
      %v1346 = vpop.f32.mrb[0].mxu0
      %v1347 = vpop.f32.mrb[0].mxu0
      %v1348 = vadd.f32 %v1084, %v1347
      %v1349 = vpop.f32.mrb[0].mxu0
      %1350 = vmatprep.mubr.bf16.mxu0 %v972
      %1351 = vmatmul.mubr.bf16.gmra.mrb[0].mxu0 %v971
      %v1352 = vpop.f32.mrb[0].mxu0
      %v1353 = vadd.f32 %v1084, %v1352
      %v1354 = vpop.f32.mrb[0].mxu0
      %v1355 = vpop.f32.mrb[0].mxu0
      %v1356 = vadd.f32 %v1084, %v1355
      %v1357 = vpop.f32.mrb[0].mxu0
      %1358 = vmatprep.mubr.bf16.mxu0 %v976
      %1359 = vmatmul.mubr.bf16.gmra.mrb[0].mxu0 %v975
      %v1360 = vpop.f32.mrb[0].mxu0
      %v1361 = vadd.f32 %v1084, %v1360
      %v1362 = vpop.f32.mrb[0].mxu0
      %v1363 = vpop.f32.mrb[0].mxu0
      %v1364 = vadd.f32 %v1084, %v1363
      %v1365 = vpop.f32.mrb[0].mxu0
      %1366 = vmatprep.mubr.bf16.mxu0 %v980
      %1367 = vmatmul.mubr.bf16.gmra.mrb[0].mxu0 %v979
      %v1368 = vpop.f32.mrb[0].mxu0
      %v1369 = vadd.f32 %v1084, %v1368
      %v1370 = vpop.f32.mrb[0].mxu0
      %v1371 = vpop.f32.mrb[0].mxu0
      %v1372 = vadd.f32 %v1084, %v1371
      %v1373 = vpop.f32.mrb[0].mxu0
      %1374 = vmatprep.mubr.bf16.mxu0 %v984
      %1375 = vmatmul.mubr.bf16.gmra.mrb[0].mxu0 %v983
      %v1376 = vpop.f32.mrb[0].mxu0
      %v1377 = vadd.f32 %v1084, %v1376
      %v1378 = vpop.f32.mrb[0].mxu0
      %v1379 = vpop.f32.mrb[0].mxu0
      %v1380 = vadd.f32 %v1084, %v1379
      %v1381 = vpop.f32.mrb[0].mxu0
      %1382 = vmatprep.mubr.bf16.mxu0 %v988
      %1383 = vmatmul.mubr.bf16.gmra.mrb[0].mxu0 %v987
      %v1384 = vpop.f32.mrb[0].mxu0
      %v1385 = vadd.f32 %v1084, %v1384
      %v1386 = vpop.f32.mrb[0].mxu0
      %v1387 = vpop.f32.mrb[0].mxu0
      %v1388 = vadd.f32 %v1084, %v1387
      %v1389 = vpop.f32.mrb[0].mxu0
      %1390 = vmatprep.mubr.bf16.mxu0 %v992
      %1391 = vmatmul.mubr.bf16.gmra.mrb[0].mxu0 %v991
      %v1392 = vpop.f32.mrb[0].mxu0
      %v1393 = vadd.f32 %v1084, %v1392
      %v1394 = vpop.f32.mrb[0].mxu0
      %v1395 = vpop.f32.mrb[0].mxu0
      %v1396 = vadd.f32 %v1084, %v1395
      %v1397 = vpop.f32.mrb[0].mxu0
      %1398 = vmatprep.mubr.bf16.mxu0 %v996
      %1399 = vmatmul.mubr.bf16.gmra.mrb[0].mxu0 %v995
      %v1400 = vpop.f32.mrb[0].mxu0
      %v1401 = vadd.f32 %v1084, %v1400
      %v1402 = vpop.f32.mrb[0].mxu0
      %v1403 = vpop.f32.mrb[0].mxu0
      %v1404 = vadd.f32 %v1084, %v1403
      %v1405 = vpop.f32.mrb[0].mxu0
      %1406 = vmatprep.mubr.bf16.mxu0 %v1000
      %1407 = vmatmul.mubr.bf16.gmra.mrb[0].mxu0 %v999
      %v1408 = vpop.f32.mrb[0].mxu0
      %v1409 = vadd.f32 %v1084, %v1408
      %v1410 = vpop.f32.mrb[0].mxu0
      %v1411 = vpop.f32.mrb[0].mxu0
      %v1412 = vadd.f32 %v1084, %v1411
      %v1413 = vpop.f32.mrb[0].mxu0
      %1414 = vmatprep.mubr.bf16.mxu0 %v1004
      %1415 = vmatmul.mubr.bf16.gmra.mrb[0].mxu0 %v1003
      %v1416 = vpop.f32.mrb[0].mxu0
      %v1417 = vadd.f32 %v1084, %v1416
      %v1418 = vpop.f32.mrb[0].mxu0
      %v1419 = vpop.f32.mrb[0].mxu0
      %v1420 = vadd.f32 %v1084, %v1419
      %v1421 = vpop.f32.mrb[0].mxu0
      %1422 = vmatprep.mubr.bf16.mxu0 %v1008
      %1423 = vmatmul.mubr.bf16.gmra.mrb[0].mxu0 %v1007
      %v1424 = vpop.f32.mrb[0].mxu0
      %v1425 = vadd.f32 %v1084, %v1424
      %v1426 = vpop.f32.mrb[0].mxu0
      %v1427 = vpop.f32.mrb[0].mxu0
      %v1428 = vadd.f32 %v1084, %v1427
      %v1429 = vpop.f32.mrb[0].mxu0
      %1430 = vmatprep.mubr.bf16.mxu0 %v1012
      %1431 = vmatmul.mubr.bf16.gmra.mrb[0].mxu0 %v1011
      %v1432 = vpop.f32.mrb[0].mxu0
      %v1433 = vadd.f32 %v1084, %v1432
      %v1434 = vpop.f32.mrb[0].mxu0
      %v1435 = vpop.f32.mrb[0].mxu0
      %v1436 = vadd.f32 %v1084, %v1435
      %v1437 = vpop.f32.mrb[0].mxu0
      %1438 = vdwg.mxu0
      %1439 = vmatprep.subr.bf16.mxu0 0
      %1440 = vmatpush1.bf16.msra.mxu0 %v1230
      %1441 = vmatprep.subr.bf16.mxu0 0
      %1442 = vmatpush1.bf16.msra.mxu0 %v1231
      %1443 = vmatprep.subr.bf16.mxu0 0
      %1444 = vmatpush1.bf16.msra.mxu0 %v1232
      %1445 = vmatprep.subr.bf16.mxu0 0
      %1446 = vmatpush1.bf16.msra.mxu0 %v1233
      %1447 = vmatprep.subr.bf16.mxu0 0
      %1448 = vmatpush1.bf16.msra.mxu0 %v1234
      %1449 = vmatprep.subr.bf16.mxu0 0
      %1450 = vmatpush1.bf16.msra.mxu0 %v1235
      %1451 = vmatprep.subr.bf16.mxu0 0
      %1452 = vmatpush1.bf16.msra.mxu0 %v1236
      %1453 = vmatprep.subr.bf16.mxu0 0
      %1454 = vmatpush1.bf16.msra.mxu0 %v1237
      %1455 = vmatprep.subr.bf16.mxu0 0
      %1456 = vmatpush1.bf16.msra.mxu0 %v1238
      %1457 = vmatprep.subr.bf16.mxu0 0
      %1458 = vmatpush1.bf16.msra.mxu0 %v1239
      %1459 = vmatprep.subr.bf16.mxu0 0
      %1460 = vmatpush1.bf16.msra.mxu0 %v1240
      %1461 = vmatprep.subr.bf16.mxu0 0
      %1462 = vmatpush1.bf16.msra.mxu0 %v1241
      %1463 = vmatprep.subr.bf16.mxu0 0
      %1464 = vmatpush1.bf16.msra.mxu0 %v1242
      %1465 = vmatprep.subr.bf16.mxu0 0
      %1466 = vmatpush1.bf16.msra.mxu0 %v1243
      %1467 = vmatprep.subr.bf16.mxu0 0
      %1468 = vmatpush1.bf16.msra.mxu0 %v1244
      %1469 = vmatprep.subr.bf16.mxu0 0
      %1470 = vmatpush1.bf16.msra.mxu0 %v1245
      %1471 = vmatprep.mubr.bf16.mxu0 %v954
      %1472 = vmatmul.mubr.bf16.gmra.mrb[0].mxu0 %v953
      %v1473 = vpop.f32.mrb[0].mxu0
      %v1474 = vadd.f32 %v1313, %v1473
      %v1475 = vpop.f32.mrb[0].mxu0
      %v1476 = vpop.f32.mrb[0].mxu0
      %v1477 = vadd.f32 %v1316, %v1476
      %v1478 = vpop.f32.mrb[0].mxu0
      %1479 = vmatprep.mubr.bf16.mxu0 %v958
      %1480 = vmatmul.mubr.bf16.gmra.mrb[0].mxu0 %v957
      %v1481 = vpop.f32.mrb[0].mxu0
      %v1482 = vadd.f32 %v1321, %v1481
      %v1483 = vpop.f32.mrb[0].mxu0
      %v1484 = vpop.f32.mrb[0].mxu0
      %v1485 = vadd.f32 %v1324, %v1484
      %v1486 = vpop.f32.mrb[0].mxu0
      %1487 = vmatprep.mubr.bf16.mxu0 %v962
      %1488 = vmatmul.mubr.bf16.gmra.mrb[0].mxu0 %v961
      %v1489 = vpop.f32.mrb[0].mxu0
      %v1490 = vadd.f32 %v1329, %v1489
      %v1491 = vpop.f32.mrb[0].mxu0
      %v1492 = vpop.f32.mrb[0].mxu0
      %v1493 = vadd.f32 %v1332, %v1492
      %v1494 = vpop.f32.mrb[0].mxu0
      %1495 = vmatprep.mubr.bf16.mxu0 %v966
      %1496 = vmatmul.mubr.bf16.gmra.mrb[0].mxu0 %v965
      %v1497 = vpop.f32.mrb[0].mxu0
      %v1498 = vadd.f32 %v1337, %v1497
      %v1499 = vpop.f32.mrb[0].mxu0
      %v1500 = vpop.f32.mrb[0].mxu0
      %v1501 = vadd.f32 %v1340, %v1500
      %v1502 = vpop.f32.mrb[0].mxu0
      %1503 = vmatprep.mubr.bf16.mxu0 %v970
      %1504 = vmatmul.mubr.bf16.gmra.mrb[0].mxu0 %v969
      %v1505 = vpop.f32.mrb[0].mxu0
      %v1506 = vadd.f32 %v1345, %v1505
      %v1507 = vpop.f32.mrb[0].mxu0
      %v1508 = vpop.f32.mrb[0].mxu0
      %v1509 = vadd.f32 %v1348, %v1508
      %v1510 = vpop.f32.mrb[0].mxu0
      %1511 = vmatprep.mubr.bf16.mxu0 %v974
      %1512 = vmatmul.mubr.bf16.gmra.mrb[0].mxu0 %v973
      %v1513 = vpop.f32.mrb[0].mxu0
      %v1514 = vadd.f32 %v1353, %v1513
      %v1515 = vpop.f32.mrb[0].mxu0
      %v1516 = vpop.f32.mrb[0].mxu0
      %v1517 = vadd.f32 %v1356, %v1516
      %v1518 = vpop.f32.mrb[0].mxu0
      %1519 = vmatprep.mubr.bf16.mxu0 %v978
      %1520 = vmatmul.mubr.bf16.gmra.mrb[0].mxu0 %v977
      %v1521 = vpop.f32.mrb[0].mxu0
      %v1522 = vadd.f32 %v1361, %v1521
      %v1523 = vpop.f32.mrb[0].mxu0
      %v1524 = vpop.f32.mrb[0].mxu0
      %v1525 = vadd.f32 %v1364, %v1524
      %v1526 = vpop.f32.mrb[0].mxu0
      %1527 = vmatprep.mubr.bf16.mxu0 %v982
      %1528 = vmatmul.mubr.bf16.gmra.mrb[0].mxu0 %v981
      %v1529 = vpop.f32.mrb[0].mxu0
      %v1530 = vadd.f32 %v1369, %v1529
      %v1531 = vpop.f32.mrb[0].mxu0
      %v1532 = vpop.f32.mrb[0].mxu0
      %v1533 = vadd.f32 %v1372, %v1532
      %v1534 = vpop.f32.mrb[0].mxu0
      %1535 = vmatprep.mubr.bf16.mxu0 %v986
      %1536 = vmatmul.mubr.bf16.gmra.mrb[0].mxu0 %v985
      %v1537 = vpop.f32.mrb[0].mxu0
      %v1538 = vadd.f32 %v1377, %v1537
      %v1539 = vpop.f32.mrb[0].mxu0
      %v1540 = vpop.f32.mrb[0].mxu0
      %v1541 = vadd.f32 %v1380, %v1540
      %v1542 = vpop.f32.mrb[0].mxu0
      %1543 = vmatprep.mubr.bf16.mxu0 %v990
      %1544 = vmatmul.mubr.bf16.gmra.mrb[0].mxu0 %v989
      %v1545 = vpop.f32.mrb[0].mxu0
      %v1546 = vadd.f32 %v1385, %v1545
      %v1547 = vpop.f32.mrb[0].mxu0
      %v1548 = vpop.f32.mrb[0].mxu0
      %v1549 = vadd.f32 %v1388, %v1548
      %v1550 = vpop.f32.mrb[0].mxu0
      %1551 = vmatprep.mubr.bf16.mxu0 %v994
      %1552 = vmatmul.mubr.bf16.gmra.mrb[0].mxu0 %v993
      %v1553 = vpop.f32.mrb[0].mxu0
      %v1554 = vadd.f32 %v1393, %v1553
      %v1555 = vpop.f32.mrb[0].mxu0
      %v1556 = vpop.f32.mrb[0].mxu0
      %v1557 = vadd.f32 %v1396, %v1556
      %v1558 = vpop.f32.mrb[0].mxu0
      %1559 = vmatprep.mubr.bf16.mxu0 %v998
      %1560 = vmatmul.mubr.bf16.gmra.mrb[0].mxu0 %v997
      %v1561 = vpop.f32.mrb[0].mxu0
      %v1562 = vadd.f32 %v1401, %v1561
      %v1563 = vpop.f32.mrb[0].mxu0
      %v1564 = vpop.f32.mrb[0].mxu0
      %v1565 = vadd.f32 %v1404, %v1564
      %v1566 = vpop.f32.mrb[0].mxu0
      %1567 = vmatprep.mubr.bf16.mxu0 %v1002
      %1568 = vmatmul.mubr.bf16.gmra.mrb[0].mxu0 %v1001
      %v1569 = vpop.f32.mrb[0].mxu0
      %v1570 = vadd.f32 %v1409, %v1569
      %v1571 = vpop.f32.mrb[0].mxu0
      %v1572 = vpop.f32.mrb[0].mxu0
      %v1573 = vadd.f32 %v1412, %v1572
      %v1574 = vpop.f32.mrb[0].mxu0
      %1575 = vmatprep.mubr.bf16.mxu0 %v1006
      %1576 = vmatmul.mubr.bf16.gmra.mrb[0].mxu0 %v1005
      %v1577 = vpop.f32.mrb[0].mxu0
      %v1578 = vadd.f32 %v1417, %v1577
      %v1579 = vpop.f32.mrb[0].mxu0
      %v1580 = vpop.f32.mrb[0].mxu0
      %v1581 = vadd.f32 %v1420, %v1580
      %v1582 = vpop.f32.mrb[0].mxu0
      %1583 = vmatprep.mubr.bf16.mxu0 %v1010
      %1584 = vmatmul.mubr.bf16.gmra.mrb[0].mxu0 %v1009
      %v1585 = vpop.f32.mrb[0].mxu0
      %v1586 = vadd.f32 %v1425, %v1585
      %v1587 = vpop.f32.mrb[0].mxu0
      %v1588 = vpop.f32.mrb[0].mxu0
      %v1589 = vadd.f32 %v1428, %v1588
      %v1590 = vpop.f32.mrb[0].mxu0
      %1591 = vmatprep.mubr.bf16.mxu0 %v1014
      %1592 = vmatmul.mubr.bf16.gmra.mrb[0].mxu0 %v1013
      %v1593 = vpop.f32.mrb[0].mxu0
      %v1594 = vadd.f32 %v1433, %v1593
      %v1595 = vpop.f32.mrb[0].mxu0
      %v1596 = vpop.f32.mrb[0].mxu0
      %v1597 = vadd.f32 %v1436, %v1596
      %v1598 = vpop.f32.mrb[0].mxu0
      %1599 = vdwg.mxu0
      %v1600 = vlaneseq
      %v1601 = vand.u32 %v1600, 127
      %vm1602 = vcmp.lt.s32.totalorder %v1601, 4
      %v1603 = vsel %vm1602, %v1474, -inf
      %v1604 = vsel %vm1602, %v1477, -inf
      %v1605 = vsel %vm1602, %v1482, -inf
      %v1606 = vsel %vm1602, %v1485, -inf
      %v1607 = vsel %vm1602, %v1490, -inf
      %v1608 = vsel %vm1602, %v1493, -inf
      %v1609 = vsel %vm1602, %v1498, -inf
      %v1610 = vsel %vm1602, %v1501, -inf
      %v1611 = vsel %vm1602, %v1506, -inf
      %v1612 = vsel %vm1602, %v1509, -inf
      %v1613 = vsel %vm1602, %v1514, -inf
      %v1614 = vsel %vm1602, %v1517, -inf
      %v1615 = vsel %vm1602, %v1522, -inf
      %v1616 = vsel %vm1602, %v1525, -inf
      %v1617 = vsel %vm1602, %v1530, -inf
      %v1618 = vsel %vm1602, %v1533, -inf
      %v1619 = vsel %vm1602, %v1538, -inf
      %v1620 = vsel %vm1602, %v1541, -inf
      %v1621 = vsel %vm1602, %v1546, -inf
      %v1622 = vsel %vm1602, %v1549, -inf
      %v1623 = vsel %vm1602, %v1554, -inf
      %v1624 = vsel %vm1602, %v1557, -inf
      %v1625 = vsel %vm1602, %v1562, -inf
      %v1626 = vsel %vm1602, %v1565, -inf
      %v1627 = vsel %vm1602, %v1570, -inf
      %v1628 = vsel %vm1602, %v1573, -inf
      %v1629 = vsel %vm1602, %v1578, -inf
      %v1630 = vsel %vm1602, %v1581, -inf
      %v1631 = vsel %vm1602, %v1586, -inf
      %v1632 = vsel %vm1602, %v1589, -inf
      %v1633 = vsel %vm1602, %v1594, -inf
      %v1634 = vsel %vm1602, %v1597, -inf
      %1635 = vmax.xlane.f32.xlu0 %v1603
      %v1636 = vpop.xlane.xlu0 %1635
      %1637 = vmax.xlane.f32.xlu0 %v1604
      %v1638 = vpop.xlane.xlu0 %1637
      %1639 = vmax.xlane.f32.xlu0 %v1605
      %v1640 = vpop.xlane.xlu0 %1639
      %1641 = vmax.xlane.f32.xlu0 %v1606
      %v1642 = vpop.xlane.xlu0 %1641
      %1643 = vmax.xlane.f32.xlu0 %v1607
      %v1644 = vpop.xlane.xlu0 %1643
      %1645 = vmax.xlane.f32.xlu0 %v1608
      %v1646 = vpop.xlane.xlu0 %1645
      %1647 = vmax.xlane.f32.xlu0 %v1609
      %v1648 = vpop.xlane.xlu0 %1647
      %1649 = vmax.xlane.f32.xlu0 %v1610
      %v1650 = vpop.xlane.xlu0 %1649
      %1651 = vmax.xlane.f32.xlu0 %v1611
      %v1652 = vpop.xlane.xlu0 %1651
      %1653 = vmax.xlane.f32.xlu0 %v1612
      %v1654 = vpop.xlane.xlu0 %1653
      %1655 = vmax.xlane.f32.xlu0 %v1613
      %v1656 = vpop.xlane.xlu0 %1655
      %1657 = vmax.xlane.f32.xlu0 %v1614
      %v1658 = vpop.xlane.xlu0 %1657
      %1659 = vmax.xlane.f32.xlu0 %v1615
      %v1660 = vpop.xlane.xlu0 %1659
      %1661 = vmax.xlane.f32.xlu0 %v1616
      %v1662 = vpop.xlane.xlu0 %1661
      %1663 = vmax.xlane.f32.xlu0 %v1617
      %v1664 = vpop.xlane.xlu0 %1663
      %1665 = vmax.xlane.f32.xlu0 %v1618
      %v1666 = vpop.xlane.xlu0 %1665
      %1667 = vmax.xlane.f32.xlu0 %v1619
      %v1668 = vpop.xlane.xlu0 %1667
      %1669 = vmax.xlane.f32.xlu0 %v1620
      %v1670 = vpop.xlane.xlu0 %1669
      %1671 = vmax.xlane.f32.xlu0 %v1621
      %v1672 = vpop.xlane.xlu0 %1671
      %1673 = vmax.xlane.f32.xlu0 %v1622
      %v1674 = vpop.xlane.xlu0 %1673
      %1675 = vmax.xlane.f32.xlu0 %v1623
      %v1676 = vpop.xlane.xlu0 %1675
      %1677 = vmax.xlane.f32.xlu0 %v1624
      %v1678 = vpop.xlane.xlu0 %1677
      %1679 = vmax.xlane.f32.xlu0 %v1625
      %v1680 = vpop.xlane.xlu0 %1679
      %1681 = vmax.xlane.f32.xlu0 %v1626
      %v1682 = vpop.xlane.xlu0 %1681
      %1683 = vmax.xlane.f32.xlu0 %v1627
      %v1684 = vpop.xlane.xlu0 %1683
      %1685 = vmax.xlane.f32.xlu0 %v1628
      %v1686 = vpop.xlane.xlu0 %1685
      %1687 = vmax.xlane.f32.xlu0 %v1629
      %v1688 = vpop.xlane.xlu0 %1687
      %1689 = vmax.xlane.f32.xlu0 %v1630
      %v1690 = vpop.xlane.xlu0 %1689
      %1691 = vmax.xlane.f32.xlu0 %v1631
      %v1692 = vpop.xlane.xlu0 %1691
      %1693 = vmax.xlane.f32.xlu0 %v1632
      %v1694 = vpop.xlane.xlu0 %1693
      %1695 = vmax.xlane.f32.xlu0 %v1633
      %v1696 = vpop.xlane.xlu0 %1695
      %1697 = vmax.xlane.f32.xlu0 %v1634
      %v1698 = vpop.xlane.xlu0 %1697
      %v1699 = vsub.f32 %v1603, %v1636
      %v1700 = vsub.f32 %v1604, %v1638
      %v1701 = vsub.f32 %v1605, %v1640
      %v1702 = vsub.f32 %v1606, %v1642
      %v1703 = vsub.f32 %v1607, %v1644
      %v1704 = vsub.f32 %v1608, %v1646
      %v1705 = vsub.f32 %v1609, %v1648
      %v1706 = vsub.f32 %v1610, %v1650
      %v1707 = vsub.f32 %v1611, %v1652
      %v1708 = vsub.f32 %v1612, %v1654
      %v1709 = vsub.f32 %v1613, %v1656
      %v1710 = vsub.f32 %v1614, %v1658
      %v1711 = vsub.f32 %v1615, %v1660
      %v1712 = vsub.f32 %v1616, %v1662
      %v1713 = vsub.f32 %v1617, %v1664
      %v1714 = vsub.f32 %v1618, %v1666
      %v1715 = vsub.f32 %v1619, %v1668
      %v1716 = vsub.f32 %v1620, %v1670
      %v1717 = vsub.f32 %v1621, %v1672
      %v1718 = vsub.f32 %v1622, %v1674
      %v1719 = vsub.f32 %v1623, %v1676
      %v1720 = vsub.f32 %v1624, %v1678
      %v1721 = vsub.f32 %v1625, %v1680
      %v1722 = vsub.f32 %v1626, %v1682
      %v1723 = vsub.f32 %v1627, %v1684
      %v1724 = vsub.f32 %v1628, %v1686
      %v1725 = vsub.f32 %v1629, %v1688
      %v1726 = vsub.f32 %v1630, %v1690
      %v1727 = vsub.f32 %v1631, %v1692
      %v1728 = vsub.f32 %v1632, %v1694
      %v1729 = vsub.f32 %v1633, %v1696
      %v1730 = vsub.f32 %v1634, %v1698
      %v1731 = vmul.f32 %v1699, 1.442695
      %v1732 = vpow.pop %v1731
      %v1733 = vmul.f32 %v1700, 1.442695
      %v1734 = vpow.pop %v1733
      %v1735 = vmul.f32 %v1701, 1.442695
      %v1736 = vpow.pop %v1735
      %v1737 = vmul.f32 %v1702, 1.442695
      %v1738 = vpow.pop %v1737
      %v1739 = vmul.f32 %v1703, 1.442695
      %v1740 = vpow.pop %v1739
      %v1741 = vmul.f32 %v1704, 1.442695
      %v1742 = vpow.pop %v1741
      %v1743 = vmul.f32 %v1705, 1.442695
      %v1744 = vpow.pop %v1743
      %v1745 = vmul.f32 %v1706, 1.442695
      %v1746 = vpow.pop %v1745
      %v1747 = vmul.f32 %v1707, 1.442695
      %v1748 = vpow.pop %v1747
      %v1749 = vmul.f32 %v1708, 1.442695
      %v1750 = vpow.pop %v1749
      %v1751 = vmul.f32 %v1709, 1.442695
      %v1752 = vpow.pop %v1751
      %v1753 = vmul.f32 %v1710, 1.442695
      %v1754 = vpow.pop %v1753
      %v1755 = vmul.f32 %v1711, 1.442695
      %v1756 = vpow.pop %v1755
      %v1757 = vmul.f32 %v1712, 1.442695
      %v1758 = vpow.pop %v1757
      %v1759 = vmul.f32 %v1713, 1.442695
      %v1760 = vpow.pop %v1759
      %v1761 = vmul.f32 %v1714, 1.442695
      %v1762 = vpow.pop %v1761
      %v1763 = vmul.f32 %v1715, 1.442695
      %v1764 = vpow.pop %v1763
      %v1765 = vmul.f32 %v1716, 1.442695
      %v1766 = vpow.pop %v1765
      %v1767 = vmul.f32 %v1717, 1.442695
      %v1768 = vpow.pop %v1767
      %v1769 = vmul.f32 %v1718, 1.442695
      %v1770 = vpow.pop %v1769
      %v1771 = vmul.f32 %v1719, 1.442695
      %v1772 = vpow.pop %v1771
      %v1773 = vmul.f32 %v1720, 1.442695
      %v1774 = vpow.pop %v1773
      %v1775 = vmul.f32 %v1721, 1.442695
      %v1776 = vpow.pop %v1775
      %v1777 = vmul.f32 %v1722, 1.442695
      %v1778 = vpow.pop %v1777
      %v1779 = vmul.f32 %v1723, 1.442695
      %v1780 = vpow.pop %v1779
      %v1781 = vmul.f32 %v1724, 1.442695
      %v1782 = vpow.pop %v1781
      %v1783 = vmul.f32 %v1725, 1.442695
      %v1784 = vpow.pop %v1783
      %v1785 = vmul.f32 %v1726, 1.442695
      %v1786 = vpow.pop %v1785
      %v1787 = vmul.f32 %v1727, 1.442695
      %v1788 = vpow.pop %v1787
      %v1789 = vmul.f32 %v1728, 1.442695
      %v1790 = vpow.pop %v1789
      %v1791 = vmul.f32 %v1729, 1.442695
      %v1792 = vpow.pop %v1791
      %v1793 = vmul.f32 %v1730, 1.442695
      %v1794 = vpow.pop %v1793
      %1795 = vadd.xlane.f32.xlu0 %v1732
      %v1796 = vpop.xlane.xlu0 %1795
      %1797 = vadd.xlane.f32.xlu0 %v1734
      %v1798 = vpop.xlane.xlu0 %1797
      %1799 = vadd.xlane.f32.xlu0 %v1736
      %v1800 = vpop.xlane.xlu0 %1799
      %1801 = vadd.xlane.f32.xlu0 %v1738
      %v1802 = vpop.xlane.xlu0 %1801
      %1803 = vadd.xlane.f32.xlu0 %v1740
      %v1804 = vpop.xlane.xlu0 %1803
      %1805 = vadd.xlane.f32.xlu0 %v1742
      %v1806 = vpop.xlane.xlu0 %1805
      %1807 = vadd.xlane.f32.xlu0 %v1744
      %v1808 = vpop.xlane.xlu0 %1807
      %1809 = vadd.xlane.f32.xlu0 %v1746
      %v1810 = vpop.xlane.xlu0 %1809
      %1811 = vadd.xlane.f32.xlu0 %v1748
      %v1812 = vpop.xlane.xlu0 %1811
      %1813 = vadd.xlane.f32.xlu0 %v1750
      %v1814 = vpop.xlane.xlu0 %1813
      %1815 = vadd.xlane.f32.xlu0 %v1752
      %v1816 = vpop.xlane.xlu0 %1815
      %1817 = vadd.xlane.f32.xlu0 %v1754
      %v1818 = vpop.xlane.xlu0 %1817
      %1819 = vadd.xlane.f32.xlu0 %v1756
      %v1820 = vpop.xlane.xlu0 %1819
      %1821 = vadd.xlane.f32.xlu0 %v1758
      %v1822 = vpop.xlane.xlu0 %1821
      %1823 = vadd.xlane.f32.xlu0 %v1760
      %v1824 = vpop.xlane.xlu0 %1823
      %1825 = vadd.xlane.f32.xlu0 %v1762
      %v1826 = vpop.xlane.xlu0 %1825
      %1827 = vadd.xlane.f32.xlu0 %v1764
      %v1828 = vpop.xlane.xlu0 %1827
      %1829 = vadd.xlane.f32.xlu0 %v1766
      %v1830 = vpop.xlane.xlu0 %1829
      %1831 = vadd.xlane.f32.xlu0 %v1768
      %v1832 = vpop.xlane.xlu0 %1831
      %1833 = vadd.xlane.f32.xlu0 %v1770
      %v1834 = vpop.xlane.xlu0 %1833
      %1835 = vadd.xlane.f32.xlu0 %v1772
      %v1836 = vpop.xlane.xlu0 %1835
      %1837 = vadd.xlane.f32.xlu0 %v1774
      %v1838 = vpop.xlane.xlu0 %1837
      %1839 = vadd.xlane.f32.xlu0 %v1776
      %v1840 = vpop.xlane.xlu0 %1839
      %1841 = vadd.xlane.f32.xlu0 %v1778
      %v1842 = vpop.xlane.xlu0 %1841
      %1843 = vadd.xlane.f32.xlu0 %v1780
      %v1844 = vpop.xlane.xlu0 %1843
      %1845 = vadd.xlane.f32.xlu0 %v1782
      %v1846 = vpop.xlane.xlu0 %1845
      %1847 = vadd.xlane.f32.xlu0 %v1784
      %v1848 = vpop.xlane.xlu0 %1847
      %1849 = vadd.xlane.f32.xlu0 %v1786
      %v1850 = vpop.xlane.xlu0 %1849
      %1851 = vadd.xlane.f32.xlu0 %v1788
      %v1852 = vpop.xlane.xlu0 %1851
      %1853 = vadd.xlane.f32.xlu0 %v1790
      %v1854 = vpop.xlane.xlu0 %1853
      %1855 = vadd.xlane.f32.xlu0 %v1792
      %v1856 = vpop.xlane.xlu0 %1855
      %1857 = vadd.xlane.f32.xlu0 %v1794
      %v1858 = vpop.xlane.xlu0 %1857
      %v1859 = vrcp.pop %v1796
      %v1860 = vmul.f32 %v1732, %v1859
      %v1861 = vrcp.pop %v1798
      %v1862 = vmul.f32 %v1734, %v1861
      %v1863 = vrcp.pop %v1800
      %v1864 = vmul.f32 %v1736, %v1863
      %v1865 = vrcp.pop %v1802
      %v1866 = vmul.f32 %v1738, %v1865
      %v1867 = vrcp.pop %v1804
      %v1868 = vmul.f32 %v1740, %v1867
      %v1869 = vrcp.pop %v1806
      %v1870 = vmul.f32 %v1742, %v1869
      %v1871 = vrcp.pop %v1808
      %v1872 = vmul.f32 %v1744, %v1871
      %v1873 = vrcp.pop %v1810
      %v1874 = vmul.f32 %v1746, %v1873
      %v1875 = vrcp.pop %v1812
      %v1876 = vmul.f32 %v1748, %v1875
      %v1877 = vrcp.pop %v1814
      %v1878 = vmul.f32 %v1750, %v1877
      %v1879 = vrcp.pop %v1816
      %v1880 = vmul.f32 %v1752, %v1879
      %v1881 = vrcp.pop %v1818
      %v1882 = vmul.f32 %v1754, %v1881
      %v1883 = vrcp.pop %v1820
      %v1884 = vmul.f32 %v1756, %v1883
      %v1885 = vrcp.pop %v1822
      %v1886 = vmul.f32 %v1758, %v1885
      %v1887 = vrcp.pop %v1824
      %v1888 = vmul.f32 %v1760, %v1887
      %v1889 = vrcp.pop %v1826
      %v1890 = vmul.f32 %v1762, %v1889
      %v1891 = vrcp.pop %v1828
      %v1892 = vmul.f32 %v1764, %v1891
      %v1893 = vrcp.pop %v1830
      %v1894 = vmul.f32 %v1766, %v1893
      %v1895 = vrcp.pop %v1832
      %v1896 = vmul.f32 %v1768, %v1895
      %v1897 = vrcp.pop %v1834
      %v1898 = vmul.f32 %v1770, %v1897
      %v1899 = vrcp.pop %v1836
      %v1900 = vmul.f32 %v1772, %v1899
      %v1901 = vrcp.pop %v1838
      %v1902 = vmul.f32 %v1774, %v1901
      %v1903 = vrcp.pop %v1840
      %v1904 = vmul.f32 %v1776, %v1903
      %v1905 = vrcp.pop %v1842
      %v1906 = vmul.f32 %v1778, %v1905
      %v1907 = vrcp.pop %v1844
      %v1908 = vmul.f32 %v1780, %v1907
      %v1909 = vrcp.pop %v1846
      %v1910 = vmul.f32 %v1782, %v1909
      %v1911 = vrcp.pop %v1848
      %v1912 = vmul.f32 %v1784, %v1911
      %v1913 = vrcp.pop %v1850
      %v1914 = vmul.f32 %v1786, %v1913
      %v1915 = vrcp.pop %v1852
      %v1916 = vmul.f32 %v1788, %v1915
      %v1917 = vrcp.pop %v1854
      %v1918 = vmul.f32 %v1790, %v1917
      %v1919 = vrcp.pop %v1856
      %v1920 = vmul.f32 %v1792, %v1919
      %v1921 = vrcp.pop %v1858
      %v1922 = vmul.f32 %v1794, %v1921
      %v1923 = vsel %vm1602, %v1860, %v1474
      %v1924 = vsel %vm1602, %v1862, %v1477
      %v1925 = vsel %vm1602, %v1864, %v1482
      %v1926 = vsel %vm1602, %v1866, %v1485
      %v1927 = vsel %vm1602, %v1868, %v1490
      %v1928 = vsel %vm1602, %v1870, %v1493
      %v1929 = vsel %vm1602, %v1872, %v1498
      %v1930 = vsel %vm1602, %v1874, %v1501
      %v1931 = vsel %vm1602, %v1876, %v1506
      %v1932 = vsel %vm1602, %v1878, %v1509
      %v1933 = vsel %vm1602, %v1880, %v1514
      %v1934 = vsel %vm1602, %v1882, %v1517
      %v1935 = vsel %vm1602, %v1884, %v1522
      %v1936 = vsel %vm1602, %v1886, %v1525
      %v1937 = vsel %vm1602, %v1888, %v1530
      %v1938 = vsel %vm1602, %v1890, %v1533
      %v1939 = vsel %vm1602, %v1892, %v1538
      %v1940 = vsel %vm1602, %v1894, %v1541
      %v1941 = vsel %vm1602, %v1896, %v1546
      %v1942 = vsel %vm1602, %v1898, %v1549
      %v1943 = vsel %vm1602, %v1900, %v1554
      %v1944 = vsel %vm1602, %v1902, %v1557
      %v1945 = vsel %vm1602, %v1904, %v1562
      %v1946 = vsel %vm1602, %v1906, %v1565
      %v1947 = vsel %vm1602, %v1908, %v1570
      %v1948 = vsel %vm1602, %v1910, %v1573
      %v1949 = vsel %vm1602, %v1912, %v1578
      %v1950 = vsel %vm1602, %v1914, %v1581
      %v1951 = vsel %vm1602, %v1916, %v1586
      %v1952 = vsel %vm1602, %v1918, %v1589
      %v1953 = vsel %vm1602, %v1920, %v1594
      %v1954 = vsel %vm1602, %v1922, %v1597
      %1955 = vst [vmem:[%s226] sm:$0xff] %v1923
      %1956 = vst [vmem:[%s226 + $0x8] sm:$0xff] %v1924
      %1957 = vst [vmem:[%s226 + $0x10] sm:$0xff] %v1925
      %1958 = vst [vmem:[%s226 + $0x18] sm:$0xff] %v1926
      %1959 = vst [vmem:[%s226 + $0x20] sm:$0xff] %v1927
      %1960 = vst [vmem:[%s226 + $0x28] sm:$0xff] %v1928
      %1961 = vst [vmem:[%s226 + $0x30] sm:$0xff] %v1929
      %1962 = vst [vmem:[%s226 + $0x38] sm:$0xff] %v1930
      %1963 = vst [vmem:[%s226 + $0x40] sm:$0xff] %v1931
      %1964 = vst [vmem:[%s226 + $0x48] sm:$0xff] %v1932
      %1965 = vst [vmem:[%s226 + $0x50] sm:$0xff] %v1933
      %1966 = vst [vmem:[%s226 + $0x58] sm:$0xff] %v1934
      %1967 = vst [vmem:[%s226 + $0x60] sm:$0xff] %v1935
      %1968 = vst [vmem:[%s226 + $0x68] sm:$0xff] %v1936
      %1969 = vst [vmem:[%s226 + $0x70] sm:$0xff] %v1937
      %1970 = vst [vmem:[%s226 + $0x78] sm:$0xff] %v1938
      %1971 = vst [vmem:[%s226 + $0x80] sm:$0xff] %v1939
      %1972 = vst [vmem:[%s226 + $0x88] sm:$0xff] %v1940
      %1973 = vst [vmem:[%s226 + $0x90] sm:$0xff] %v1941
      %1974 = vst [vmem:[%s226 + $0x98] sm:$0xff] %v1942
      %1975 = vst [vmem:[%s226 + $0xa0] sm:$0xff] %v1943
      %1976 = vst [vmem:[%s226 + $0xa8] sm:$0xff] %v1944
      %1977 = vst [vmem:[%s226 + $0xb0] sm:$0xff] %v1945
      %1978 = vst [vmem:[%s226 + $0xb8] sm:$0xff] %v1946
      %1979 = vst [vmem:[%s226 + $0xc0] sm:$0xff] %v1947
      %1980 = vst [vmem:[%s226 + $0xc8] sm:$0xff] %v1948
      %1981 = vst [vmem:[%s226 + $0xd0] sm:$0xff] %v1949
      %1982 = vst [vmem:[%s226 + $0xd8] sm:$0xff] %v1950
      %1983 = vst [vmem:[%s226 + $0xe0] sm:$0xff] %v1951
      %1984 = vst [vmem:[%s226 + $0xe8] sm:$0xff] %v1952
      %1985 = vst [vmem:[%s226 + $0xf0] sm:$0xff] %v1953
      %1986 = vst [vmem:[%s226 + $0xf8] sm:$0xff] %v1954
      %s1987 = smul.u32 32, %s16
      %p1988 = scmp.lt.s32.totalorder %s1987, 63
      %s1989 = scalar_select %p1988, %s1987, 63
      %s1990 = smul.addr %s1989, 8
      %s1991 = scalar_lea.vmem %s5, %s1990
      // Predicated region
      $region41: #{policy_gradient_forward.1} parent=39 // pred_check
        %p1992 = pneg %p144
      $region42: #{policy_gradient_forward.1} parent=39 // pred_check_branch
        %1994 = sbr.rel (%p1992) target = $region44
      $region43: #{policy_gradient_forward.1} parent=39 // pred_region
        %s1995 = smul.u32 32, %s16
      $region44: #{policy_gradient_forward.1} parent=39 // pred_fallthru
        _
    $region40: #{policy_gradient_forward.1} parent=5 // pred_fallthru
      _
    %p1996 = scmp.le.s32.totalorder 2, %s11
    // Predicated region
    $region45: #{policy_gradient_forward.1} parent=5 // pred_check
      %p1997 = pneg %p1996
    $region46: #{policy_gradient_forward.1} parent=5 // pred_check_branch
      %1999 = sbr.rel (%p1997) target = $region48
    $region47: #{policy_gradient_forward.1} parent=5 // pred_region
      %s2000 = ssub.s32 %s11, 2
      // Predicated region
      $region49: #{policy_gradient_forward.1} parent=47 // pred_check
        %p2001 = pneg %p150
      $region50: #{policy_gradient_forward.1} parent=47 // pred_check_branch
        %2003 = sbr.rel (%p2001) target = $region52
      $region51: #{policy_gradient_forward.1} parent=47 // pred_region
        %s2004 = smul.u32 32, %s17
        %p2005 = scmp.lt.s32.totalorder %s2004, 63
        %s2006 = scalar_select %p2005, %s2004, 63
        %s2007 = smul.addr %s2006, 8
        %s2008 = scalar_lea.vmem %s5, %s2007
      $region52: #{policy_gradient_forward.1} parent=47 // pred_fallthru
        _
    $region48: #{policy_gradient_forward.1} parent=5 // pred_fallthru
      _
  $region6: #{policy_gradient_forward.1} parent=0 // loop_footer
    %s15 = sadd.s32 1, %s11
  $region7: #{policy_gradient_forward.1} parent=0 // loop_footer_branch
    %10 = sbr.rel target = $region3
  $region8: #{policy_gradient_forward.1} parent=0 // loop_exit
    _

</llo_original>
